<compile_context>
chip_gen: v7x
topology: tpu7x:2x2x1
jax: 0.10.0
libtpu: 0.0.40
codegen_flags: <defaults>
</compile_context>

<pallas_src>
import functools

import jax
import jax.numpy as jnp
from jax.experimental import pallas as pl
from jax.experimental.pallas import tpu as pltpu


_VMEM_LIMIT_BYTES = 32 * 1024 * 1024          # safe on v5e/v6e/v7x scoped VMEM


def _pick_bblk(n, per_image_bytes, budget_bytes=8 << 20):
    """Largest divisor of n whose per-step working set fits the budget while
    keeping at least 2 grid steps when n >= 2 (so both v7x TCs get work)."""
    best = 1
    for d in range(1, n + 1):
        if n % d:
            continue
        if d * per_image_bytes > budget_bytes:
            continue
        if n >= 2 and (n // d) < 2:
            continue
        best = d
    return best


# ----------------------------------------------------------------------------
# Layout plumbing (cheap XLA copies, no 9x expansion).
#
# Per batch element the conv input is the spatially zero-padded image
# (H+2, W+2, C) flattened to ((H+2)*(W+2) + 2, C).  For tap (kh, kw) the rows
# needed by output position q = i*(W+2) + j are rows q + kh*(W+2) + kw, so the
# 3x3 conv is a single matmul over the 9 shifted slices concatenated along the
# contraction dim.  Output columns j in {W, W+1} of each row are garbage; they
# are sliced away by the wrapper (and masked inside the pool reduction only).
# ----------------------------------------------------------------------------
def _pack_conv_input(x_nhwc):
    N, H, W, C = x_nhwc.shape
    xp = jnp.pad(x_nhwc, ((0, 0), (1, 1), (1, 1), (0, 0)))
    flat = xp.reshape(N, (H + 2) * (W + 2), C)
    return jnp.pad(flat, ((0, 0), (0, 2), (0, 0)))          # +2 zero tail rows


def _valid_col_mask(H, W):
    """(H*(W+2), 1) f32 mask: 1 for valid output columns, 0 for the 2 pad cols."""
    Wp = W + 2
    cols = (jnp.arange(Wp, dtype=jnp.int32) < W).astype(jnp.float32)
    return jnp.broadcast_to(cols, (H, Wp)).reshape(H * Wp, 1)


# ----------------------------------------------------------------------------
# Kernel 1: conv1 (3x3, pad 1) + folded BN1 + ReLU, packed-K matmul.
# ----------------------------------------------------------------------------
def _conv1_kernel(x_ref, w_ref, scale_ref, bias_ref, o_ref, *, Lq, Wp, bblk):
    for b in range(bblk):
        taps = [x_ref[b, pl.ds(kh * Wp + kw, Lq), :]          # (Lq, Cin) bf16
                for kh in range(3) for kw in range(3)]
        lhs = jnp.concatenate(taps, axis=-1)                  # (Lq, 9*Cin) bf16
        acc = jnp.dot(lhs, w_ref[...], preferred_element_type=jnp.float32)
        out = jnp.maximum(acc * scale_ref[...] + bias_ref[...], 0.0)
        o_ref[b] = out.astype(o_ref.dtype)


def conv1_bn_relu(x_flat, wp, scale, bias, *, H, W, bblk):
    N, Lin, _ = x_flat.shape
    K9, Cout = wp.shape
    Wpd = W + 2
    Lq = H * Wpd
    kernel = functools.partial(_conv1_kernel, Lq=Lq, Wp=Wpd, bblk=bblk)
    return pl.pallas_call(
        kernel,
        out_shape=jax.ShapeDtypeStruct((N, Lq, Cout), jnp.bfloat16),
        grid=(N // bblk,),
        in_specs=[
            pl.BlockSpec((bblk, Lin, x_flat.shape[-1]), lambda n: (n, 0, 0)),
            pl.BlockSpec((K9, Cout), lambda n: (0, 0)),
            pl.BlockSpec((1, Cout), lambda n: (0, 0)),
            pl.BlockSpec((1, Cout), lambda n: (0, 0)),
        ],
        out_specs=pl.BlockSpec((bblk, Lq, Cout), lambda n: (n, 0, 0)),
        compiler_params=pltpu.CompilerParams(
            dimension_semantics=("parallel",),
            vmem_limit_bytes=_VMEM_LIMIT_BYTES),
    )(x_flat, wp, scale, bias)


# ----------------------------------------------------------------------------
# Kernel 2 (fused): conv2 (3x3) + folded BN2 + masked global-avg-pool +
#   SE fc1/ReLU/fc2/sigmoid + channel scale + (optional 1x1 downsample GEMM +
#   folded BN on the residual) + residual add + final ReLU.
# ----------------------------------------------------------------------------
def _conv2_se_kernel(*refs, Lq, Wp, inv_hw, bblk, has_down):
    if has_down:
        (y_ref, xs_ref, w_ref, scale_ref, bias_ref, mask_ref,
         dw_ref, dscale_ref, dbias_ref,
         sw1_ref, sb1_ref, sw2_ref, sb2_ref, o_ref) = refs
    else:
        (y_ref, xs_ref, w_ref, scale_ref, bias_ref, mask_ref,
         sw1_ref, sb1_ref, sw2_ref, sb2_ref, o_ref) = refs

    for b in range(bblk):
        # Packed-K 3x3 conv + folded BN2 (no ReLU).
        taps = [y_ref[b, pl.ds(kh * Wp + kw, Lq), :]
                for kh in range(3) for kw in range(3)]
        lhs = jnp.concatenate(taps, axis=-1)                  # (Lq, 9*C) bf16
        acc = jnp.dot(lhs, w_ref[...], preferred_element_type=jnp.float32)
        y = acc * scale_ref[...] + bias_ref[...]              # (Lq, C) f32

        # SE gate: masked global average pool -> fc1 -> ReLU -> fc2 -> sigmoid.
        pooled = jnp.sum(y * mask_ref[...], axis=0, keepdims=True) * inv_hw
        h = jnp.dot(pooled, sw1_ref[...], preferred_element_type=jnp.float32)
        h = jnp.maximum(h + sb1_ref[...], 0.0)
        z = jnp.dot(h, sw2_ref[...],
                    preferred_element_type=jnp.float32) + sb2_ref[...]
        gate = 1.0 / (1.0 + jnp.exp(-z))                      # (1, C) f32

        # Residual path (optional 1x1 downsample conv + folded BN), in-kernel.
        res = xs_ref[b]                                       # (Lq, Cres) bf16
        if has_down:
            res = jnp.dot(res, dw_ref[...], preferred_element_type=jnp.float32)
            res = res * dscale_ref[...] + dbias_ref[...]
        else:
            res = res.astype(jnp.float32)

        # Channel scale + residual add + final ReLU, lane-width bf16 store.
        o_ref[b] = jnp.maximum(y * gate + res, 0.0).astype(o_ref.dtype)


def conv2_se_residual(y_flat, xs_flat, wp, scale, bias, mask,
                      se_w1, se_b1, se_w2, se_b2, down=None, *, H, W, bblk):
    N, Lin, C = y_flat.shape
    K9, Cout = wp.shape
    Cres = xs_flat.shape[-1]
    hidden = se_w1.shape[-1]
    Wpd = W + 2
    Lq = H * Wpd
    has_down = down is not None

    kernel = functools.partial(_conv2_se_kernel, Lq=Lq, Wp=Wpd,
                               inv_hw=1.0 / float(H * W), bblk=bblk,
                               has_down=has_down)
    args = [y_flat, xs_flat, wp, scale, bias, mask]
    in_specs = [
        pl.BlockSpec((bblk, Lin, C), lambda n: (n, 0, 0)),
        pl.BlockSpec((bblk, Lq, Cres), lambda n: (n, 0, 0)),
        pl.BlockSpec((K9, Cout), lambda n: (0, 0)),
        pl.BlockSpec((1, Cout), lambda n: (0, 0)),
        pl.BlockSpec((1, Cout), lambda n: (0, 0)),
        pl.BlockSpec((Lq, 1), lambda n: (0, 0)),
    ]
    if has_down:
        dw, dscale, dbias = down
        args += [dw, dscale, dbias]
        in_specs += [
            pl.BlockSpec((Cres, Cout), lambda n: (0, 0)),
            pl.BlockSpec((1, Cout), lambda n: (0, 0)),
            pl.BlockSpec((1, Cout), lambda n: (0, 0)),
        ]
    args += [se_w1, se_b1, se_w2, se_b2]
    in_specs += [
        pl.BlockSpec((Cout, hidden), lambda n: (0, 0)),
        pl.BlockSpec((1, hidden), lambda n: (0, 0)),
        pl.BlockSpec((hidden, Cout), lambda n: (0, 0)),
        pl.BlockSpec((1, Cout), lambda n: (0, 0)),
    ]
    return pl.pallas_call(
        kernel,
        out_shape=jax.ShapeDtypeStruct((N, Lq, Cout), jnp.bfloat16),
        grid=(N // bblk,),
        in_specs=in_specs,
        out_specs=pl.BlockSpec((bblk, Lq, Cout), lambda n: (n, 0, 0)),
        compiler_params=pltpu.CompilerParams(
            dimension_semantics=("parallel",),
            vmem_limit_bytes=_VMEM_LIMIT_BYTES),
    )(*args)


# ----------------------------------------------------------------------------
# Block forward (NCHW in / NCHW out, matching the PyTorch module).
# ----------------------------------------------------------------------------
def cifar_se_basic_block(x_nchw, p, *, stride=1):
    x = jnp.transpose(x_nchw, (0, 2, 3, 1)).astype(jnp.float32)    # NHWC
    N, H, W, Cin = x.shape
    Cout = p["conv1_w"].shape[-1]
    x_bf = x.astype(jnp.bfloat16)

    # --- out = relu(bn1(conv1(x))) ----------------------------------------
    w1p = p["conv1_w"].reshape(9 * Cin, Cout).astype(jnp.bfloat16)
    Lq1 = H * (W + 2)
    Lin1 = (H + 2) * (W + 2) + 2
    per_img1 = 2 * (Lin1 * Cin + Lq1 * Cout + Lq1 * 9 * Cin) + 4 * Lq1 * Cout
    bblk1 = _pick_bblk(N, per_img1)
    y1 = conv1_bn_relu(_pack_conv_input(x_bf), w1p, p["bn1_scale"],
                       p["bn1_bias"], H=H, W=W, bblk=bblk1)
    y1 = y1.reshape(N, H, W + 2, Cout)[:, :, :W, :]
    if stride > 1:
        # TODO(synk): stride>1 is done as stride-1 conv + subsample (exact but
        # redundant compute); a strided-row index variant would avoid it.
        y1 = y1[:, ::stride, ::stride, :]
    Ho, Wo = y1.shape[1], y1.shape[2]

    # --- residual source in the same flattened padded-width layout ---------
    xs = x_bf[:, ::stride, ::stride, :]            # 1x1-conv stride == subsample
    xs = jnp.pad(xs, ((0, 0), (0, 0), (0, 2), (0, 0)))
    xs = xs.reshape(N, Ho * (Wo + 2), xs.shape[-1])

    has_down = "down_w" in p
    down = None
    if has_down:
        down = (p["down_w"].astype(jnp.bfloat16), p["down_scale"], p["down_bias"])
    # TODO(synk): the PyTorch identity shortcut is shape-invalid for stride>1
    # when inplanes == planes; we subsample the identity so the block runs.

    # --- out = relu(se(bn2(conv2(out))) + residual), single fused kernel ---
    w2p = p["conv2_w"].reshape(9 * Cout, Cout).astype(jnp.bfloat16)
    Lq2 = Ho * (Wo + 2)
    Lin2 = (Ho + 2) * (Wo + 2) + 2
    per_img2 = (2 * (Lin2 * Cout + Lq2 * xs.shape[-1] + Lq2 * Cout
                     + Lq2 * 9 * Cout) + 3 * 4 * Lq2 * Cout)
    bblk2 = _pick_bblk(N, per_img2)
    out = conv2_se_residual(_pack_conv_input(y1), xs, w2p,
                            p["bn2_scale"], p["bn2_bias"],
                            _valid_col_mask(Ho, Wo),
                            p["se_w1"], p["se_b1"], p["se_w2"], p["se_b2"],
                            down, H=Ho, W=Wo, bblk=bblk2)
    out = out.reshape(N, Ho, Wo + 2, Cout)[:, :, :Wo, :]
    return jnp.transpose(out, (0, 3, 1, 2)).astype(jnp.float32)     # NCHW


# ----------------------------------------------------------------------------
# Deterministic synthetic parameters (BN folded, eval mode, fresh stats).
# ----------------------------------------------------------------------------
def init_params(key, inplanes, planes, reduction, eps=1e-5):
    ks = jax.random.split(key, 10)
    hidden = planes // reduction

    def bn(k):
        gamma = 1.0 + 0.1 * jax.random.normal(k, (1, planes), jnp.float32)
        beta = 0.1 * jax.random.normal(jax.random.fold_in(k, 1), (1, planes),
                                       jnp.float32)
        scale = gamma / jnp.sqrt(1.0 + eps)     # running_mean=0, running_var=1
        bias = beta
        return scale, bias

    p = {}
    p["conv1_w"] = 0.1 * jax.random.normal(ks[0], (3, 3, inplanes, planes), jnp.float32)
    p["conv2_w"] = 0.1 * jax.random.normal(ks[1], (3, 3, planes, planes), jnp.float32)
    p["bn1_scale"], p["bn1_bias"] = bn(ks[2])
    p["bn2_scale"], p["bn2_bias"] = bn(ks[3])
    p["se_w1"] = 0.2 * jax.random.normal(ks[4], (planes, hidden), jnp.float32)
    p["se_b1"] = 0.1 * jax.random.normal(ks[5], (1, hidden), jnp.float32)
    p["se_w2"] = 0.2 * jax.random.normal(ks[6], (hidden, planes), jnp.float32)
    p["se_b2"] = 0.1 * jax.random.normal(ks[7], (1, planes), jnp.float32)
    if inplanes != planes:
        p["down_w"] = 0.1 * jax.random.normal(ks[8], (inplanes, planes), jnp.float32)
        p["down_scale"], p["down_bias"] = bn(ks[9])
    return p


if __name__ == "__main__":
    key = jax.random.PRNGKey(0)
    k_x, k_p = jax.random.split(key)

    batch, inplanes, planes, H, W = 2, 16, 32, 8, 8
    stride, reduction = 1, 4

    x = jax.random.normal(k_x, (batch, inplanes, H, W), jnp.float32)   # NCHW
    params = init_params(k_p, inplanes, planes, reduction)

    fwd = jax.jit(cifar_se_basic_block, static_argnames=("stride",))
    out = jax.block_until_ready(fwd(x, params, stride=stride))

    assert out.shape == (batch, planes, H // stride, W // stride), out.shape
    assert bool(jnp.all(jnp.isfinite(out)))
    assert bool(jnp.all(out >= 0.0))   # final ReLU
    print("KERNEL_OK")
</pallas_src>

<mosaic_0001>
module attributes {stable_mosaic.version = 11 : i64} {
  func.func @_conv1_kernel(%arg0: i32, %arg1: memref<1x102x16xbf16, #tpu.memory_space<vmem>>, %arg2: memref<144x32xbf16, #tpu.memory_space<vmem>>, %arg3: memref<1x32xf32, #tpu.memory_space<vmem>>, %arg4: memref<1x32xf32, #tpu.memory_space<vmem>>, %arg5: memref<1x80x32xbf16, #tpu.memory_space<vmem>>) attributes {dimension_semantics = [#tpu.dimension_semantics<parallel>], iteration_bounds = array<i64: 2>, scalar_prefetch = 0 : i64, scratch_operands = 0 : i64, tpu.core_type = #tpu.core_type<tc>, window_params = [{transform_indices = @transform_0, window_bounds = array<i64: 1, 102, 16>}, {pipeline_mode = #tpu.pipeline_mode<synchronous>, transform_indices = @transform_1, window_bounds = array<i64: 144, 32>}, {pipeline_mode = #tpu.pipeline_mode<synchronous>, transform_indices = @transform_2, window_bounds = array<i64: 1, 32>}, {pipeline_mode = #tpu.pipeline_mode<synchronous>, transform_indices = @transform_3, window_bounds = array<i64: 1, 32>}, {transform_indices = @transform_4, window_bounds = array<i64: 1, 80, 32>}]} {
    %c0 = arith.constant 0 : index
    %c0_0 = arith.constant 0 : index
    %c0_1 = arith.constant 0 : index
    %0 = vector.load %arg1[%c0, %c0_0, %c0_1] : memref<1x102x16xbf16, #tpu.memory_space<vmem>>, vector<1x80x16xbf16>
    %1 = vector.shape_cast %0 : vector<1x80x16xbf16> to vector<80x16xbf16>
    %c0_2 = arith.constant 0 : index
    %c1 = arith.constant 1 : index
    %c0_3 = arith.constant 0 : index
    %2 = vector.load %arg1[%c0_2, %c1, %c0_3] : memref<1x102x16xbf16, #tpu.memory_space<vmem>>, vector<1x80x16xbf16>
    %3 = vector.shape_cast %2 : vector<1x80x16xbf16> to vector<80x16xbf16>
    %c0_4 = arith.constant 0 : index
    %c2 = arith.constant 2 : index
    %c0_5 = arith.constant 0 : index
    %4 = vector.load %arg1[%c0_4, %c2, %c0_5] : memref<1x102x16xbf16, #tpu.memory_space<vmem>>, vector<1x80x16xbf16>
    %5 = vector.shape_cast %4 : vector<1x80x16xbf16> to vector<80x16xbf16>
    %c0_6 = arith.constant 0 : index
    %c10 = arith.constant 10 : index
    %c0_7 = arith.constant 0 : index
    %6 = vector.load %arg1[%c0_6, %c10, %c0_7] : memref<1x102x16xbf16, #tpu.memory_space<vmem>>, vector<1x80x16xbf16>
    %7 = vector.shape_cast %6 : vector<1x80x16xbf16> to vector<80x16xbf16>
    %c0_8 = arith.constant 0 : index
    %c11 = arith.constant 11 : index
    %c0_9 = arith.constant 0 : index
    %8 = vector.load %arg1[%c0_8, %c11, %c0_9] : memref<1x102x16xbf16, #tpu.memory_space<vmem>>, vector<1x80x16xbf16>
    %9 = vector.shape_cast %8 : vector<1x80x16xbf16> to vector<80x16xbf16>
    %c0_10 = arith.constant 0 : index
    %c12 = arith.constant 12 : index
    %c0_11 = arith.constant 0 : index
    %10 = vector.load %arg1[%c0_10, %c12, %c0_11] : memref<1x102x16xbf16, #tpu.memory_space<vmem>>, vector<1x80x16xbf16>
    %11 = vector.shape_cast %10 : vector<1x80x16xbf16> to vector<80x16xbf16>
    %c0_12 = arith.constant 0 : index
    %c20 = arith.constant 20 : index
    %c0_13 = arith.constant 0 : index
    %12 = vector.load %arg1[%c0_12, %c20, %c0_13] : memref<1x102x16xbf16, #tpu.memory_space<vmem>>, vector<1x80x16xbf16>
    %13 = vector.shape_cast %12 : vector<1x80x16xbf16> to vector<80x16xbf16>
    %c0_14 = arith.constant 0 : index
    %c21 = arith.constant 21 : index
    %c0_15 = arith.constant 0 : index
    %14 = vector.load %arg1[%c0_14, %c21, %c0_15] : memref<1x102x16xbf16, #tpu.memory_space<vmem>>, vector<1x80x16xbf16>
    %15 = vector.shape_cast %14 : vector<1x80x16xbf16> to vector<80x16xbf16>
    %c0_16 = arith.constant 0 : index
    %c22 = arith.constant 22 : index
    %c0_17 = arith.constant 0 : index
    %16 = vector.load %arg1[%c0_16, %c22, %c0_17] : memref<1x102x16xbf16, #tpu.memory_space<vmem>>, vector<1x80x16xbf16>
    %17 = vector.shape_cast %16 : vector<1x80x16xbf16> to vector<80x16xbf16>
    %18 = tpu.concatenate %1, %3, %5, %7, %9, %11, %13, %15, %17 in 1 : vector<80x16xbf16>, vector<80x16xbf16>, vector<80x16xbf16>, vector<80x16xbf16>, vector<80x16xbf16>, vector<80x16xbf16>, vector<80x16xbf16>, vector<80x16xbf16>, vector<80x16xbf16> -> vector<80x144xbf16>
    %c0_18 = arith.constant 0 : index
    %c0_19 = arith.constant 0 : index
    %19 = vector.load %arg2[%c0_18, %c0_19] : memref<144x32xbf16, #tpu.memory_space<vmem>>, vector<144x32xbf16>
    %cst = arith.constant dense<0.000000e+00> : vector<80x32xf32>
    %20 = tpu.matmul %18, %19, %cst {dimension_numbers = #tpu.dot_dimension_numbers<[1], [0], [0], [1], [0, 0, 1, 1], [], []>} : vector<80x144xbf16>, vector<144x32xbf16>, vector<80x32xf32> -> vector<80x32xf32>
    %c0_20 = arith.constant 0 : index
    %c0_21 = arith.constant 0 : index
    %21 = vector.load %arg3[%c0_20, %c0_21] : memref<1x32xf32, #tpu.memory_space<vmem>>, vector<1x32xf32>
    %22 = vector.broadcast %21 : vector<1x32xf32> to vector<80x32xf32>
    %23 = arith.mulf %20, %22 : vector<80x32xf32>
    %c0_22 = arith.constant 0 : index
    %c0_23 = arith.constant 0 : index
    %24 = vector.load %arg4[%c0_22, %c0_23] : memref<1x32xf32, #tpu.memory_space<vmem>>, vector<1x32xf32>
    %25 = vector.broadcast %24 : vector<1x32xf32> to vector<80x32xf32>
    %26 = arith.addf %23, %25 : vector<80x32xf32>
    %cst_24 = arith.constant 0.000000e+00 : f32
    %27 = vector.broadcast %cst_24 : f32 to vector<80x32xf32>
    %28 = arith.maximumf %26, %27 : vector<80x32xf32>
    %29 = arith.truncf %28 : vector<80x32xf32> to vector<80x32xbf16>
    %c0_25 = arith.constant 0 : index
    %c0_26 = arith.constant 0 : index
    %c0_27 = arith.constant 0 : index
    %30 = vector.load %arg5[%c0_25, %c0_26, %c0_27] : memref<1x80x32xbf16, #tpu.memory_space<vmem>>, vector<1x80x32xbf16>
    %31 = vector.shape_cast %30 : vector<1x80x32xbf16> to vector<80x32xbf16>
    %32 = vector.shape_cast %29 : vector<80x32xbf16> to vector<1x80x32xbf16>
    tpu.vector_store %arg5[%c0_25, %c0_26, %c0_27], %32 {strides = array<i32>} : memref<1x80x32xbf16, #tpu.memory_space<vmem>>, vector<1x80x32xbf16>,
    return
  }
  func.func @transform_0(%arg0: i32) -> (i32, i32, i32) {
    %c0_i32 = arith.constant 0 : i32
    %c0_i32_0 = arith.constant 0 : i32
    %c0_i32_1 = arith.constant 0 : i32
    return %arg0, %c0_i32, %c0_i32_0 : i32, i32, i32
  }
  func.func @transform_1(%arg0: i32) -> (i32, i32) {
    %c0_i32 = arith.constant 0 : i32
    %c0_i32_0 = arith.constant 0 : i32
    %c0_i32_1 = arith.constant 0 : i32
    return %c0_i32, %c0_i32_0 : i32, i32
  }
  func.func @transform_2(%arg0: i32) -> (i32, i32) {
    %c0_i32 = arith.constant 0 : i32
    %c0_i32_0 = arith.constant 0 : i32
    %c0_i32_1 = arith.constant 0 : i32
    return %c0_i32, %c0_i32_0 : i32, i32
  }
  func.func @transform_3(%arg0: i32) -> (i32, i32) {
    %c0_i32 = arith.constant 0 : i32
    %c0_i32_0 = arith.constant 0 : i32
    %c0_i32_1 = arith.constant 0 : i32
    return %c0_i32, %c0_i32_0 : i32, i32
  }
  func.func @transform_4(%arg0: i32) -> (i32, i32, i32) {
    %c0_i32 = arith.constant 0 : i32
    %c0_i32_0 = arith.constant 0 : i32
    %c0_i32_1 = arith.constant 0 : i32
    return %arg0, %c0_i32, %c0_i32_0 : i32, i32, i32
  }
}

module attributes {stable_mosaic.version = 11 : i64} {
  func.func @_conv2_se_kernel(%arg0: i32, %arg1: memref<1x102x32xbf16, #tpu.memory_space<vmem>>, %arg2: memref<1x80x16xbf16, #tpu.memory_space<vmem>>, %arg3: memref<288x32xbf16, #tpu.memory_space<vmem>>, %arg4: memref<1x32xf32, #tpu.memory_space<vmem>>, %arg5: memref<1x32xf32, #tpu.memory_space<vmem>>, %arg6: memref<80x1xf32, #tpu.memory_space<vmem>>, %arg7: memref<16x32xbf16, #tpu.memory_space<vmem>>, %arg8: memref<1x32xf32, #tpu.memory_space<vmem>>, %arg9: memref<1x32xf32, #tpu.memory_space<vmem>>, %arg10: memref<32x8xf32, #tpu.memory_space<vmem>>, %arg11: memref<1x8xf32, #tpu.memory_space<vmem>>, %arg12: memref<8x32xf32, #tpu.memory_space<vmem>>, %arg13: memref<1x32xf32, #tpu.memory_space<vmem>>, %arg14: memref<1x80x32xbf16, #tpu.memory_space<vmem>>) attributes {dimension_semantics = [#tpu.dimension_semantics<parallel>], iteration_bounds = array<i64: 2>, scalar_prefetch = 0 : i64, scratch_operands = 0 : i64, tpu.core_type = #tpu.core_type<tc>, window_params = [{transform_indices = @transform_0, window_bounds = array<i64: 1, 102, 32>}, {transform_indices = @transform_1, window_bounds = array<i64: 1, 80, 16>}, {pipeline_mode = #tpu.pipeline_mode<synchronous>, transform_indices = @transform_2, window_bounds = array<i64: 288, 32>}, {pipeline_mode = #tpu.pipeline_mode<synchronous>, transform_indices = @transform_3, window_bounds = array<i64: 1, 32>}, {pipeline_mode = #tpu.pipeline_mode<synchronous>, transform_indices = @transform_4, window_bounds = array<i64: 1, 32>}, {pipeline_mode = #tpu.pipeline_mode<synchronous>, transform_indices = @transform_5, window_bounds = array<i64: 80, 1>}, {pipeline_mode = #tpu.pipeline_mode<synchronous>, transform_indices = @transform_6, window_bounds = array<i64: 16, 32>}, {pipeline_mode = #tpu.pipeline_mode<synchronous>, transform_indices = @transform_7, window_bounds = array<i64: 1, 32>}, {pipeline_mode = #tpu.pipeline_mode<synchronous>, transform_indices = @transform_8, window_bounds = array<i64: 1, 32>}, {pipeline_mode = #tpu.pipeline_mode<synchronous>, transform_indices = @transform_9, window_bounds = array<i64: 32, 8>}, {pipeline_mode = #tpu.pipeline_mode<synchronous>, transform_indices = @transform_10, window_bounds = array<i64: 1, 8>}, {pipeline_mode = #tpu.pipeline_mode<synchronous>, transform_indices = @transform_11, window_bounds = array<i64: 8, 32>}, {pipeline_mode = #tpu.pipeline_mode<synchronous>, transform_indices = @transform_12, window_bounds = array<i64: 1, 32>}, {transform_indices = @transform_13, window_bounds = array<i64: 1, 80, 32>}]} {
    %c0 = arith.constant 0 : index
    %c0_0 = arith.constant 0 : index
    %c0_1 = arith.constant 0 : index
    %0 = vector.load %arg1[%c0, %c0_0, %c0_1] : memref<1x102x32xbf16, #tpu.memory_space<vmem>>, vector<1x80x32xbf16>
    %1 = vector.shape_cast %0 : vector<1x80x32xbf16> to vector<80x32xbf16>
    %c0_2 = arith.constant 0 : index
    %c1 = arith.constant 1 : index
    %c0_3 = arith.constant 0 : index
    %2 = vector.load %arg1[%c0_2, %c1, %c0_3] : memref<1x102x32xbf16, #tpu.memory_space<vmem>>, vector<1x80x32xbf16>
    %3 = vector.shape_cast %2 : vector<1x80x32xbf16> to vector<80x32xbf16>
    %c0_4 = arith.constant 0 : index
    %c2 = arith.constant 2 : index
    %c0_5 = arith.constant 0 : index
    %4 = vector.load %arg1[%c0_4, %c2, %c0_5] : memref<1x102x32xbf16, #tpu.memory_space<vmem>>, vector<1x80x32xbf16>
    %5 = vector.shape_cast %4 : vector<1x80x32xbf16> to vector<80x32xbf16>
    %c0_6 = arith.constant 0 : index
    %c10 = arith.constant 10 : index
    %c0_7 = arith.constant 0 : index
    %6 = vector.load %arg1[%c0_6, %c10, %c0_7] : memref<1x102x32xbf16, #tpu.memory_space<vmem>>, vector<1x80x32xbf16>
    %7 = vector.shape_cast %6 : vector<1x80x32xbf16> to vector<80x32xbf16>
    %c0_8 = arith.constant 0 : index
    %c11 = arith.constant 11 : index
    %c0_9 = arith.constant 0 : index
    %8 = vector.load %arg1[%c0_8, %c11, %c0_9] : memref<1x102x32xbf16, #tpu.memory_space<vmem>>, vector<1x80x32xbf16>
    %9 = vector.shape_cast %8 : vector<1x80x32xbf16> to vector<80x32xbf16>
    %c0_10 = arith.constant 0 : index
    %c12 = arith.constant 12 : index
    %c0_11 = arith.constant 0 : index
    %10 = vector.load %arg1[%c0_10, %c12, %c0_11] : memref<1x102x32xbf16, #tpu.memory_space<vmem>>, vector<1x80x32xbf16>
    %11 = vector.shape_cast %10 : vector<1x80x32xbf16> to vector<80x32xbf16>
    %c0_12 = arith.constant 0 : index
    %c20 = arith.constant 20 : index
    %c0_13 = arith.constant 0 : index
    %12 = vector.load %arg1[%c0_12, %c20, %c0_13] : memref<1x102x32xbf16, #tpu.memory_space<vmem>>, vector<1x80x32xbf16>
    %13 = vector.shape_cast %12 : vector<1x80x32xbf16> to vector<80x32xbf16>
    %c0_14 = arith.constant 0 : index
    %c21 = arith.constant 21 : index
    %c0_15 = arith.constant 0 : index
    %14 = vector.load %arg1[%c0_14, %c21, %c0_15] : memref<1x102x32xbf16, #tpu.memory_space<vmem>>, vector<1x80x32xbf16>
    %15 = vector.shape_cast %14 : vector<1x80x32xbf16> to vector<80x32xbf16>
    %c0_16 = arith.constant 0 : index
    %c22 = arith.constant 22 : index
    %c0_17 = arith.constant 0 : index
    %16 = vector.load %arg1[%c0_16, %c22, %c0_17] : memref<1x102x32xbf16, #tpu.memory_space<vmem>>, vector<1x80x32xbf16>
    %17 = vector.shape_cast %16 : vector<1x80x32xbf16> to vector<80x32xbf16>
    %18 = tpu.concatenate %1, %3, %5, %7, %9, %11, %13, %15, %17 in 1 : vector<80x32xbf16>, vector<80x32xbf16>, vector<80x32xbf16>, vector<80x32xbf16>, vector<80x32xbf16>, vector<80x32xbf16>, vector<80x32xbf16>, vector<80x32xbf16>, vector<80x32xbf16> -> vector<80x288xbf16>
    %c0_18 = arith.constant 0 : index
    %c0_19 = arith.constant 0 : index
    %19 = vector.load %arg3[%c0_18, %c0_19] : memref<288x32xbf16, #tpu.memory_space<vmem>>, vector<288x32xbf16>
    %cst = arith.constant dense<0.000000e+00> : vector<80x32xf32>
    %20 = tpu.matmul %18, %19, %cst {dimension_numbers = #tpu.dot_dimension_numbers<[1], [0], [0], [1], [0, 0, 1, 1], [], []>} : vector<80x288xbf16>, vector<288x32xbf16>, vector<80x32xf32> -> vector<80x32xf32>
    %c0_20 = arith.constant 0 : index
    %c0_21 = arith.constant 0 : index
    %21 = vector.load %arg4[%c0_20, %c0_21] : memref<1x32xf32, #tpu.memory_space<vmem>>, vector<1x32xf32>
    %22 = vector.broadcast %21 : vector<1x32xf32> to vector<80x32xf32>
    %23 = arith.mulf %20, %22 : vector<80x32xf32>
    %c0_22 = arith.constant 0 : index
    %c0_23 = arith.constant 0 : index
    %24 = vector.load %arg5[%c0_22, %c0_23] : memref<1x32xf32, #tpu.memory_space<vmem>>, vector<1x32xf32>
    %25 = vector.broadcast %24 : vector<1x32xf32> to vector<80x32xf32>
    %26 = arith.addf %23, %25 : vector<80x32xf32>
    %c0_24 = arith.constant 0 : index
    %c0_25 = arith.constant 0 : index
    %27 = vector.load %arg6[%c0_24, %c0_25] : memref<80x1xf32, #tpu.memory_space<vmem>>, vector<80x1xf32>
    %28 = vector.broadcast %27 : vector<80x1xf32> to vector<80x32xf32>
    %29 = arith.mulf %26, %28 : vector<80x32xf32>
    %cst_26 = arith.constant dense<0.000000e+00> : vector<32xf32>
    %30 = vector.multi_reduction <add>, %29, %cst_26 [0] : vector<80x32xf32> to vector<32xf32>
    %31 = vector.shape_cast %30 : vector<32xf32> to vector<1x32xf32>
    %cst_27 = arith.constant 1.562500e-02 : f32
    %32 = vector.broadcast %cst_27 : f32 to vector<1x32xf32>
    %33 = arith.mulf %31, %32 : vector<1x32xf32>
    %c0_28 = arith.constant 0 : index
    %c0_29 = arith.constant 0 : index
    %34 = vector.load %arg10[%c0_28, %c0_29] : memref<32x8xf32, #tpu.memory_space<vmem>>, vector<32x8xf32>
    %cst_30 = arith.constant dense<0.000000e+00> : vector<1x8xf32>
    %35 = tpu.matmul %33, %34, %cst_30 {dimension_numbers = #tpu.dot_dimension_numbers<[1], [0], [0], [1], [0, 0, 1, 1], [], []>} : vector<1x32xf32>, vector<32x8xf32>, vector<1x8xf32> -> vector<1x8xf32>
    %c0_31 = arith.constant 0 : index
    %c0_32 = arith.constant 0 : index
    %36 = vector.load %arg11[%c0_31, %c0_32] : memref<1x8xf32, #tpu.memory_space<vmem>>, vector<1x8xf32>
    %37 = arith.addf %35, %36 : vector<1x8xf32>
    %cst_33 = arith.constant 0.000000e+00 : f32
    %38 = vector.broadcast %cst_33 : f32 to vector<1x8xf32>
    %39 = arith.maximumf %37, %38 : vector<1x8xf32>
    %c0_34 = arith.constant 0 : index
    %c0_35 = arith.constant 0 : index
    %40 = vector.load %arg12[%c0_34, %c0_35] : memref<8x32xf32, #tpu.memory_space<vmem>>, vector<8x32xf32>
    %cst_36 = arith.constant dense<0.000000e+00> : vector<1x32xf32>
    %41 = tpu.matmul %39, %40, %cst_36 {dimension_numbers = #tpu.dot_dimension_numbers<[1], [0], [0], [1], [0, 0, 1, 1], [], []>} : vector<1x8xf32>, vector<8x32xf32>, vector<1x32xf32> -> vector<1x32xf32>
    %c0_37 = arith.constant 0 : index
    %c0_38 = arith.constant 0 : index
    %42 = vector.load %arg13[%c0_37, %c0_38] : memref<1x32xf32, #tpu.memory_space<vmem>>, vector<1x32xf32>
    %43 = arith.addf %41, %42 : vector<1x32xf32>
    %cst_39 = arith.constant 0.000000e+00 : f32
    %44 = vector.broadcast %cst_39 : f32 to vector<1x32xf32>
    %45 = arith.subf %44, %43 : vector<1x32xf32>
    %46 = math.exp %45 : vector<1x32xf32>
    %cst_40 = arith.constant 1.000000e+00 : f32
    %47 = vector.broadcast %cst_40 : f32 to vector<1x32xf32>
    %48 = arith.addf %47, %46 : vector<1x32xf32>
    %cst_41 = arith.constant 1.000000e+00 : f32
    %49 = vector.broadcast %cst_41 : f32 to vector<1x32xf32>
    %50 = arith.divf %49, %48 : vector<1x32xf32>
    %c0_42 = arith.constant 0 : index
    %c0_43 = arith.constant 0 : index
    %c0_44 = arith.constant 0 : index
    %51 = vector.load %arg2[%c0_42, %c0_43, %c0_44] : memref<1x80x16xbf16, #tpu.memory_space<vmem>>, vector<1x80x16xbf16>
    %52 = vector.shape_cast %51 : vector<1x80x16xbf16> to vector<80x16xbf16>
    %c0_45 = arith.constant 0 : index
    %c0_46 = arith.constant 0 : index
    %53 = vector.load %arg7[%c0_45, %c0_46] : memref<16x32xbf16, #tpu.memory_space<vmem>>, vector<16x32xbf16>
    %cst_47 = arith.constant dense<0.000000e+00> : vector<80x32xf32>
    %54 = tpu.matmul %52, %53, %cst_47 {dimension_numbers = #tpu.dot_dimension_numbers<[1], [0], [0], [1], [0, 0, 1, 1], [], []>} : vector<80x16xbf16>, vector<16x32xbf16>, vector<80x32xf32> -> vector<80x32xf32>
    %c0_48 = arith.constant 0 : index
    %c0_49 = arith.constant 0 : index
    %55 = vector.load %arg8[%c0_48, %c0_49] : memref<1x32xf32, #tpu.memory_space<vmem>>, vector<1x32xf32>
    %56 = vector.broadcast %55 : vector<1x32xf32> to vector<80x32xf32>
    %57 = arith.mulf %54, %56 : vector<80x32xf32>
    %c0_50 = arith.constant 0 : index
    %c0_51 = arith.constant 0 : index
    %58 = vector.load %arg9[%c0_50, %c0_51] : memref<1x32xf32, #tpu.memory_space<vmem>>, vector<1x32xf32>
    %59 = vector.broadcast %58 : vector<1x32xf32> to vector<80x32xf32>
    %60 = arith.addf %57, %59 : vector<80x32xf32>
    %61 = vector.broadcast %50 : vector<1x32xf32> to vector<80x32xf32>
    %62 = arith.mulf %26, %61 : vector<80x32xf32>
    %63 = arith.addf %62, %60 : vector<80x32xf32>
    %cst_52 = arith.constant 0.000000e+00 : f32
    %64 = vector.broadcast %cst_52 : f32 to vector<80x32xf32>
    %65 = arith.maximumf %63, %64 : vector<80x32xf32>
    %66 = arith.truncf %65 : vector<80x32xf32> to vector<80x32xbf16>
    %c0_53 = arith.constant 0 : index
    %c0_54 = arith.constant 0 : index
    %c0_55 = arith.constant 0 : index
    %67 = vector.load %arg14[%c0_53, %c0_54, %c0_55] : memref<1x80x32xbf16, #tpu.memory_space<vmem>>, vector<1x80x32xbf16>
    %68 = vector.shape_cast %67 : vector<1x80x32xbf16> to vector<80x32xbf16>
    %69 = vector.shape_cast %66 : vector<80x32xbf16> to vector<1x80x32xbf16>
    tpu.vector_store %arg14[%c0_53, %c0_54, %c0_55], %69 {strides = array<i32>} : memref<1x80x32xbf16, #tpu.memory_space<vmem>>, vector<1x80x32xbf16>,
    return
  }
  func.func @transform_0(%arg0: i32) -> (i32, i32, i32) {
    %c0_i32 = arith.constant 0 : i32
    %c0_i32_0 = arith.constant 0 : i32
    %c0_i32_1 = arith.constant 0 : i32
    return %arg0, %c0_i32, %c0_i32_0 : i32, i32, i32
  }
  func.func @transform_1(%arg0: i32) -> (i32, i32, i32) {
    %c0_i32 = arith.constant 0 : i32
    %c0_i32_0 = arith.constant 0 : i32
    %c0_i32_1 = arith.constant 0 : i32
    return %arg0, %c0_i32, %c0_i32_0 : i32, i32, i32
  }
  func.func @transform_2(%arg0: i32) -> (i32, i32) {
    %c0_i32 = arith.constant 0 : i32
    %c0_i32_0 = arith.constant 0 : i32
    %c0_i32_1 = arith.constant 0 : i32
    return %c0_i32, %c0_i32_0 : i32, i32
  }
  func.func @transform_3(%arg0: i32) -> (i32, i32) {
    %c0_i32 = arith.constant 0 : i32
    %c0_i32_0 = arith.constant 0 : i32
    %c0_i32_1 = arith.constant 0 : i32
    return %c0_i32, %c0_i32_0 : i32, i32
  }
  func.func @transform_4(%arg0: i32) -> (i32, i32) {
    %c0_i32 = arith.constant 0 : i32
    %c0_i32_0 = arith.constant 0 : i32
    %c0_i32_1 = arith.constant 0 : i32
    return %c0_i32, %c0_i32_0 : i32, i32
  }
  func.func @transform_5(%arg0: i32) -> (i32, i32) {
    %c0_i32 = arith.constant 0 : i32
    %c0_i32_0 = arith.constant 0 : i32
    %c0_i32_1 = arith.constant 0 : i32
    return %c0_i32, %c0_i32_0 : i32, i32
  }
  func.func @transform_6(%arg0: i32) -> (i32, i32) {
    %c0_i32 = arith.constant 0 : i32
    %c0_i32_0 = arith.constant 0 : i32
    %c0_i32_1 = arith.constant 0 : i32
    return %c0_i32, %c0_i32_0 : i32, i32
  }
  func.func @transform_7(%arg0: i32) -> (i32, i32) {
    %c0_i32 = arith.constant 0 : i32
    %c0_i32_0 = arith.constant 0 : i32
    %c0_i32_1 = arith.constant 0 : i32
    return %c0_i32, %c0_i32_0 : i32, i32
  }
  func.func @transform_8(%arg0: i32) -> (i32, i32) {
    %c0_i32 = arith.constant 0 : i32
    %c0_i32_0 = arith.constant 0 : i32
    %c0_i32_1 = arith.constant 0 : i32
    return %c0_i32, %c0_i32_0 : i32, i32
  }
  func.func @transform_9(%arg0: i32) -> (i32, i32) {
    %c0_i32 = arith.constant 0 : i32
    %c0_i32_0 = arith.constant 0 : i32
    %c0_i32_1 = arith.constant 0 : i32
    return %c0_i32, %c0_i32_0 : i32, i32
  }
  func.func @transform_10(%arg0: i32) -> (i32, i32) {
    %c0_i32 = arith.constant 0 : i32
    %c0_i32_0 = arith.constant 0 : i32
    %c0_i32_1 = arith.constant 0 : i32
    return %c0_i32, %c0_i32_0 : i32, i32
  }
  func.func @transform_11(%arg0: i32) -> (i32, i32) {
    %c0_i32 = arith.constant 0 : i32
    %c0_i32_0 = arith.constant 0 : i32
    %c0_i32_1 = arith.constant 0 : i32
    return %c0_i32, %c0_i32_0 : i32, i32
  }
  func.func @transform_12(%arg0: i32) -> (i32, i32) {
    %c0_i32 = arith.constant 0 : i32
    %c0_i32_0 = arith.constant 0 : i32
    %c0_i32_1 = arith.constant 0 : i32
    return %c0_i32, %c0_i32_0 : i32, i32
  }
  func.func @transform_13(%arg0: i32) -> (i32, i32, i32) {
    %c0_i32 = arith.constant 0 : i32
    %c0_i32_0 = arith.constant 0 : i32
    %c0_i32_1 = arith.constant 0 : i32
    return %arg0, %c0_i32, %c0_i32_0 : i32, i32, i32
  }
}

</mosaic_0001>

<llo_original>
// kernel: cifar_se_basic_block.2
$region0: #{cifar_se_basic_block.2}
  #allocation0 [shape = 'u32[]', space=smem, size = 0x4, offset = 0x4, fixed_abs, tag = 'smem constant byte address 0x4 - core index']
  #allocation1 [shape = 'u32[144,128]{1,0:T(1,128)}', space=vmem, size = 0x12000, scoped, tag = 'internal scratch']
  %s0 = inlined_call_operand.vmem [shape: bf16[2,102,16], index: 0, kind: input, shape index: {}]
  %s1 = inlined_call_operand.vmem [shape: bf16[144,32], index: 1, kind: input, shape index: {}]
  %s2 = inlined_call_operand.vmem [shape: f32[1,32], index: 2, kind: input, shape index: {}]
  %s3 = inlined_call_operand.vmem [shape: f32[1,32], index: 3, kind: input, shape index: {}]
  %s4 = inlined_call_operand.vmem [shape: bf16[2,80,32], index: 4, kind: output, shape index: {}]
  %s5 = sld [smem:[#allocation0]]
  $region49: #{cifar_se_basic_block.2} parent=0
    _
  %s7 = ssub.s32 1, %s5
  %s8 = scalar_select 0, %s7, %s5
  loop: start=0, step=1, limit=4
  $region2: #{cifar_se_basic_block.2} parent=0 // loop_pre_header
    _
  $region3: #{cifar_se_basic_block.2} parent=0 // loop_header
    %s10 = sphi 0, %s14
    %p11 = scmp.ge.s32.totalorder %s10, 4
    %s20 = sphi 0, %s22
    %s23 = sphi 0, %s20
    %s24 = sphi 0, %s23
    %s40 = sphi 0, %s24
    %s44 = sphi 0, %s44
    %s46 = sphi 0, %s44
    %s47 = sphi 0, %s46
    %s61 = sphi 0, %s47
    %s65 = sphi 0, %s65
    %s67 = sphi 0, %s65
    %s68 = sphi 0, %s67
    %s82 = sphi 0, %s68
    %s86 = sphi 0, %s86
    %s88 = sphi 0, %s86
    %s89 = sphi 0, %s88
    %s103 = sphi 0, %s89
    %s109 = sphi 0, %s111
    %s112 = sphi 0, %s109
    %s113 = sphi 0, %s112
    %s129 = sphi 0, %s113
  $region4: #{cifar_se_basic_block.2} parent=0 // loop_header_branch
    %13 = sbr.rel (%p11) target = $region8
  $region5: #{cifar_se_basic_block.2} parent=0 // loop_body
    %s15 = ssub.s32 %s10, 1
    %s16 = ssub.s32 %s10, 2
    %s17 = sadd.s32 %s10, 1
    %s18 = ssub.s32 %s10, %s17
    %p19 = scmp.eq.s32.totalorder %s18, 0
    %s21 = sadd.s32 %s20, 1
    %s22 = scalar_select %p19, %s20, %s21
    %p25 = pneg %p19
    %p26 = scmp.eq.s32.totalorder %s10, 1
    %p27 = por %p25, %p26
    %p28 = scmp.ne.s32.totalorder %s20, %s23
    %p29 = scmp.eq.s32.totalorder %s10, 0
    %p30 = por %p28, %p29
    %p31 = scmp.ne.s32.totalorder %s20, %s23
    %p32 = scmp.eq.s32.totalorder %s15, 1
    %p33 = por %p31, %p32
    %p34 = scmp.ne.s32.totalorder %s23, %s24
    %p35 = scmp.eq.s32.totalorder %s15, 0
    %p36 = por %p34, %p35
    %p37 = scmp.ne.s32.totalorder %s23, %s24
    %p38 = scmp.eq.s32.totalorder %s16, 1
    %p39 = por %p37, %p38
    %p41 = scmp.ne.s32.totalorder %s24, %s40
    %p42 = scmp.eq.s32.totalorder %s16, 0
    %p43 = por %p41, %p42
    %s45 = sadd.s32 %s44, 1
    %p48 = scmp.eq.s32.totalorder %s10, 1
    %p49 = scmp.ne.s32.totalorder %s44, %s46
    %p50 = scmp.eq.s32.totalorder %s10, 0
    %p51 = por %p49, %p50
    %p52 = scmp.ne.s32.totalorder %s44, %s46
    %p53 = scmp.eq.s32.totalorder %s15, 1
    %p54 = por %p52, %p53
    %p55 = scmp.ne.s32.totalorder %s46, %s47
    %p56 = scmp.eq.s32.totalorder %s15, 0
    %p57 = por %p55, %p56
    %p58 = scmp.ne.s32.totalorder %s46, %s47
    %p59 = scmp.eq.s32.totalorder %s16, 1
    %p60 = por %p58, %p59
    %p62 = scmp.ne.s32.totalorder %s47, %s61
    %p63 = scmp.eq.s32.totalorder %s16, 0
    %p64 = por %p62, %p63
    %s66 = sadd.s32 %s65, 1
    %p69 = scmp.eq.s32.totalorder %s10, 1
    %p70 = scmp.ne.s32.totalorder %s65, %s67
    %p71 = scmp.eq.s32.totalorder %s10, 0
    %p72 = por %p70, %p71
    %p73 = scmp.ne.s32.totalorder %s65, %s67
    %p74 = scmp.eq.s32.totalorder %s15, 1
    %p75 = por %p73, %p74
    %p76 = scmp.ne.s32.totalorder %s67, %s68
    %p77 = scmp.eq.s32.totalorder %s15, 0
    %p78 = por %p76, %p77
    %p79 = scmp.ne.s32.totalorder %s67, %s68
    %p80 = scmp.eq.s32.totalorder %s16, 1
    %p81 = por %p79, %p80
    %p83 = scmp.ne.s32.totalorder %s68, %s82
    %p84 = scmp.eq.s32.totalorder %s16, 0
    %p85 = por %p83, %p84
    %s87 = sadd.s32 %s86, 1
    %p90 = scmp.eq.s32.totalorder %s10, 1
    %p91 = scmp.ne.s32.totalorder %s86, %s88
    %p92 = scmp.eq.s32.totalorder %s10, 0
    %p93 = por %p91, %p92
    %p94 = scmp.ne.s32.totalorder %s86, %s88
    %p95 = scmp.eq.s32.totalorder %s15, 1
    %p96 = por %p94, %p95
    %p97 = scmp.ne.s32.totalorder %s88, %s89
    %p98 = scmp.eq.s32.totalorder %s15, 0
    %p99 = por %p97, %p98
    %p100 = scmp.ne.s32.totalorder %s88, %s89
    %p101 = scmp.eq.s32.totalorder %s16, 1
    %p102 = por %p100, %p101
    %p104 = scmp.ne.s32.totalorder %s89, %s103
    %p105 = scmp.eq.s32.totalorder %s16, 0
    %p106 = por %p104, %p105
    %s107 = ssub.s32 %s10, %s17
    %p108 = scmp.eq.s32.totalorder %s107, 0
    %s110 = sadd.s32 %s109, 1
    %s111 = scalar_select %p108, %s109, %s110
    %p114 = pneg %p108
    %p115 = scmp.eq.s32.totalorder %s10, 1
    %p116 = por %p114, %p115
    %p117 = scmp.ne.s32.totalorder %s109, %s112
    %p118 = scmp.eq.s32.totalorder %s10, 0
    %p119 = por %p117, %p118
    %p120 = scmp.ne.s32.totalorder %s109, %s112
    %p121 = scmp.eq.s32.totalorder %s15, 1
    %p122 = por %p120, %p121
    %p123 = scmp.ne.s32.totalorder %s112, %s113
    %p124 = scmp.eq.s32.totalorder %s15, 0
    %p125 = por %p123, %p124
    %p126 = scmp.ne.s32.totalorder %s112, %s113
    %p127 = scmp.eq.s32.totalorder %s16, 1
    %p128 = por %p126, %p127
    %p130 = scmp.ne.s32.totalorder %s113, %s129
    %p131 = scmp.eq.s32.totalorder %s16, 0
    %p132 = por %p130, %p131
    %p133 = scmp.le.s32.totalorder 1, %s10
    %p134 = scmp.lt.s32.totalorder %s10, 3
    %p135 = pnand %p133, %p134
    %p136 = pneg %p135
    // Predicated region
    $region9: #{cifar_se_basic_block.2} parent=5 // pred_check
      _
    $region10: #{cifar_se_basic_block.2} parent=5 // pred_check_branch
      %138 = sbr.rel (%p135) target = $region12
    $region11: #{cifar_se_basic_block.2} parent=5 // pred_region
      %s139 = ssub.s32 %s10, 1
      // Predicated region
      $region13: #{cifar_se_basic_block.2} parent=11 // pred_check
        %p140 = pneg %p57
      $region14: #{cifar_se_basic_block.2} parent=11 // pred_check_branch
        %142 = sbr.rel (%p140) target = $region16
      $region15: #{cifar_se_basic_block.2} parent=11 // pred_region
        _
      $region16: #{cifar_se_basic_block.2} parent=11 // pred_fallthru
        _
      // Predicated region
      $region17: #{cifar_se_basic_block.2} parent=11 // pred_check
        %p143 = pneg %p78
      $region18: #{cifar_se_basic_block.2} parent=11 // pred_check_branch
        %145 = sbr.rel (%p143) target = $region20
      $region19: #{cifar_se_basic_block.2} parent=11 // pred_region
        _
      $region20: #{cifar_se_basic_block.2} parent=11 // pred_fallthru
        _
      // Predicated region
      $region21: #{cifar_se_basic_block.2} parent=11 // pred_check
        %p146 = pneg %p99
      $region22: #{cifar_se_basic_block.2} parent=11 // pred_check_branch
        %148 = sbr.rel (%p146) target = $region24
      $region23: #{cifar_se_basic_block.2} parent=11 // pred_region
        _
      $region24: #{cifar_se_basic_block.2} parent=11 // pred_fallthru
        _
    $region12: #{cifar_se_basic_block.2} parent=5 // pred_fallthru
      _
    %p149 = scmp.lt.s32.totalorder %s10, 2
    // Predicated region
    $region25: #{cifar_se_basic_block.2} parent=5 // pred_check
      %p150 = pneg %p149
    $region26: #{cifar_se_basic_block.2} parent=5 // pred_check_branch
      %152 = sbr.rel (%p150) target = $region28
    $region27: #{cifar_se_basic_block.2} parent=5 // pred_region
      // Predicated region
      $region29: #{cifar_se_basic_block.2} parent=27 // pred_check
        %p153 = pneg %p30
      $region30: #{cifar_se_basic_block.2} parent=27 // pred_check_branch
        %155 = sbr.rel (%p153) target = $region32
      $region31: #{cifar_se_basic_block.2} parent=27 // pred_region
        %p156 = scmp.lt.s32.totalorder %s10, 1
        %s157 = scalar_select %p156, %s10, 1
        %s158 = smul.addr %s157, 13
        %s159 = smul.addr %s158, 4
        %s160 = scalar_lea.vmem %s0, %s159
      $region32: #{cifar_se_basic_block.2} parent=27 // pred_fallthru
        _
    $region28: #{cifar_se_basic_block.2} parent=5 // pred_fallthru
      _
    %p161 = scmp.le.s32.totalorder 1, %s10
    %p162 = scmp.lt.s32.totalorder %s10, 3
    %p163 = pnand %p161, %p162
    %p164 = pneg %p163
    // Predicated region
    $region33: #{cifar_se_basic_block.2} parent=5 // pred_check
      _
    $region34: #{cifar_se_basic_block.2} parent=5 // pred_check_branch
      %166 = sbr.rel (%p163) target = $region36
    $region35: #{cifar_se_basic_block.2} parent=5 // pred_region
      %s167 = ssub.s32 %s10, 1
      %p168 = scmp.lt.s32.totalorder %s15, 1
      %s169 = scalar_select %p168, %s15, 1
      %s170 = smul.addr %s169, 13
      %s171 = smul.addr %s170, 4
      %s172 = scalar_lea.vmem %s0, %s171
      %p173 = pneg %p36
      %p174 = pneg %p33
      %p175 = pneg %p57
      %p176 = pneg %p54
      %p177 = pneg %p78
      %p178 = pneg %p75
      %p179 = pneg %p99
      %p180 = pneg %p96
      %p181 = pneg %p125
      %p182 = pneg %p122
      %p183 = scmp.lt.s32.totalorder %s15, 1
      %s184 = scalar_select %p183, %s15, 1
      %s185 = smul.addr %s184, 10
      %s186 = smul.addr %s185, 4
      %s187 = scalar_lea.vmem %s4, %s186
      %p188 = scmp.lt.s32.totalorder %s15, 1
      %s189 = scalar_select %p188, %s15, 1
      %s190 = smul.addr %s189, 13
      %s191 = smul.addr %s190, 4
      %s192 = scalar_lea.vmem %s0, %s191
      %p193 = scmp.lt.s32.totalorder %s15, 1
      %s194 = scalar_select %p193, %s15, 1
      %s195 = smul.addr %s194, 10
      %s196 = smul.addr %s195, 4
      %s197 = scalar_lea.vmem %s4, %s196
      %v199 = vld [vmem:[%s192] sm:$0xf]
      %v200 = vld [vmem:[%s192 + $0x4] sm:$0xf]
      %v201 = vld [vmem:[%s192 + $0x8] sm:$0xf]
      %v202 = vld [vmem:[%s192 + $0xc] sm:$0xf]
      %v203 = vld [vmem:[%s192 + $0x10] sm:$0xf]
      %v204 = vld [vmem:[%s192 + $0x14] sm:$0xf]
      %v205 = vld [vmem:[%s192 + $0x18] sm:$0xf]
      %v206 = vld [vmem:[%s192 + $0x1c] sm:$0xf]
      %v207 = vld [vmem:[%s192 + $0x20] sm:$0xf]
      %v208 = vld [vmem:[%s192 + $0x24] sm:$0xf]
      %v209 = vld [vmem:[%s192 + $0x28] sm:$0x1]
      %v210 = vld [vmem:[%s192] sm:$0xe]
      %v211 = vld [vmem:[%s192 + $0x4] sm:$0xe]
      %v212 = vld [vmem:[%s192 + $0x28] sm:$0xf]
      %v213 = vld [vmem:[%s192 + $0x2c] sm:$0x1]
      %v214 = vld [vmem:[%s192 + $0x2c] sm:$0x3]
      %v215 = vld [vmem:[%s192 + $0x4] sm:$0xc]
      %v216 = vld [vmem:[%s192 + $0x8] sm:$0xc]
      %v217 = vld [vmem:[%s192 + $0x2c] sm:$0xf]
      %v218 = vld [vmem:[%s192 + $0x30] sm:$0x3]
      %v219 = vld [vmem:[%s192 + $0x30] sm:$0x7]
      %v220 = vld [vmem:[%s192 + $0x8] sm:$0x8]
      %v231 = vunpack.c.l.b16 %v199
      %v232 = vunpack.c.l.b16 %v200
      %v233 = vunpack.c.l.b16 %v201
      %v234 = vunpack.c.l.b16 %v202
      %v235 = vunpack.c.l.b16 %v203
      %v236 = vunpack.c.l.b16 %v204
      %v237 = vunpack.c.l.b16 %v205
      %v238 = vunpack.c.l.b16 %v206
      %v239 = vunpack.c.l.b16 %v207
      %v240 = vunpack.c.l.b16 %v208
      %v241 = vpack.c.b16 %v232, %v231
      %v242 = vpack.c.b16 %v234, %v233
      %v243 = vpack.c.b16 %v236, %v235
      %v244 = vpack.c.b16 %v238, %v237
      %v245 = vpack.c.b16 %v240, %v239
      %v247 = vunpack.c.l.b16 %v209
      %v248 = vpack.c.b16 %v247, %v247
      %vm249 = vsmask.f32 7424
      %v251 = vshrl.u32 %v241, 16
      %v253 = vshll.u32 %v241, 16
      %v255 = vrot.slane %v253, 1
      %v256 = vor.u32 %v251, %v255
      %v258 = vshll.u32 %v242, 16
      %v260 = vrot.slane %v258, 1
      %v261 = vsel %vm249, %v256, %v260
      %v262 = vshrl.u32 %v242, 16
      %v264 = vor.u32 %v262, %v260
      %v266 = vshll.u32 %v243, 16
      %v268 = vrot.slane %v266, 1
      %v269 = vsel %vm249, %v264, %v268
      %v270 = vshrl.u32 %v243, 16
      %v272 = vor.u32 %v270, %v268
      %v274 = vshll.u32 %v244, 16
      %v276 = vrot.slane %v274, 1
      %v277 = vsel %vm249, %v272, %v276
      %v278 = vshrl.u32 %v244, 16
      %v280 = vor.u32 %v278, %v276
      %v282 = vshll.u32 %v245, 16
      %v284 = vrot.slane %v282, 1
      %v285 = vsel %vm249, %v280, %v284
      %v286 = vshrl.u32 %v245, 16
      %v288 = vor.u32 %v286, %v284
      %v290 = vshll.u32 %v248, 16
      %v292 = vrot.slane %v290, 1
      %v293 = vsel %vm249, %v288, %v292
      %294 = vrot.lane.b32.xlu0 %v261, 16
      %v295 = vpop.permute.xlu0 %294
      %296 = vrot.lane.b32.xlu0 %v269, 16
      %v297 = vpop.permute.xlu0 %296
      %298 = vrot.lane.b32.xlu0 %v277, 16
      %v299 = vpop.permute.xlu0 %298
      %300 = vrot.lane.b32.xlu0 %v285, 16
      %v301 = vpop.permute.xlu0 %300
      %302 = vrot.lane.b32.xlu0 %v293, 16
      %v303 = vpop.permute.xlu0 %302
      %v305 = vunpack.c.l.b16 %v210
      %v306 = vpack.c.b16 %v232, %v305
      %vm307 = vcmask 1046528
      %v308 = vrot.slane %v306, 1
      %v309 = vrot.slane %v242, 1
      %v310 = vsel %vm307, %v308, %v309
      %v311 = vrot.slane %v243, 1
      %v312 = vsel %vm307, %v309, %v311
      %v313 = vrot.slane %v244, 1
      %v314 = vsel %vm307, %v311, %v313
      %v315 = vrot.slane %v245, 1
      %v316 = vsel %vm307, %v313, %v315
      %v317 = vrot.slane %v248, 1
      %v318 = vsel %vm307, %v315, %v317
      %319 = vrot.lane.b32.xlu0 %v310, 32
      %v320 = vpop.permute.xlu0 %319
      %321 = vrot.lane.b32.xlu0 %v312, 32
      %v322 = vpop.permute.xlu0 %321
      %323 = vrot.lane.b32.xlu0 %v314, 32
      %v324 = vpop.permute.xlu0 %323
      %325 = vrot.lane.b32.xlu0 %v316, 32
      %v326 = vpop.permute.xlu0 %325
      %327 = vrot.lane.b32.xlu0 %v318, 32
      %v328 = vpop.permute.xlu0 %327
      %v332 = vunpack.c.l.b16 %v211
      %v333 = vunpack.c.l.b16 %v212
      %v334 = vunpack.c.l.b16 %v213
      %v335 = vpack.c.b16 %v233, %v332
      %v336 = vpack.c.b16 %v235, %v234
      %v337 = vpack.c.b16 %v237, %v236
      %v338 = vpack.c.b16 %v239, %v238
      %v339 = vpack.c.b16 %v333, %v240
      %v340 = vpack.c.b16 %v334, %v334
      %v341 = vrot.slane %v335, 1
      %v342 = vrot.slane %v336, 1
      %v343 = vsel %vm307, %v341, %v342
      %v344 = vrot.slane %v337, 1
      %v345 = vsel %vm307, %v342, %v344
      %v346 = vrot.slane %v338, 1
      %v347 = vsel %vm307, %v344, %v346
      %v348 = vrot.slane %v339, 1
      %v349 = vsel %vm307, %v346, %v348
      %v350 = vrot.slane %v340, 1
      %v351 = vsel %vm307, %v348, %v350
      %352 = vrot.lane.b32.xlu0 %v343, 48
      %v353 = vpop.permute.xlu0 %352
      %354 = vrot.lane.b32.xlu0 %v345, 48
      %v355 = vpop.permute.xlu0 %354
      %356 = vrot.lane.b32.xlu0 %v347, 48
      %v357 = vpop.permute.xlu0 %356
      %358 = vrot.lane.b32.xlu0 %v349, 48
      %v359 = vpop.permute.xlu0 %358
      %360 = vrot.lane.b32.xlu0 %v351, 48
      %v361 = vpop.permute.xlu0 %360
      %v363 = vunpack.c.l.b16 %v214
      %v364 = vpack.c.b16 %v363, %v363
      %vm365 = vsmask.f32 6400
      %v367 = vshrl.u32 %v335, 16
      %v369 = vrot.slane %v367, 1
      %v370 = vshll.u32 %v335, 16
      %v372 = vrot.slane %v370, 2
      %v373 = vor.u32 %v369, %v372
      %v375 = vshrl.u32 %v336, 16
      %v377 = vrot.slane %v375, 1
      %v378 = vshll.u32 %v336, 16
      %v380 = vrot.slane %v378, 2
      %v381 = vor.u32 %v377, %v380
      %v382 = vsel %vm365, %v373, %v381
      %v384 = vshrl.u32 %v337, 16
      %v386 = vrot.slane %v384, 1
      %v387 = vshll.u32 %v337, 16
      %v389 = vrot.slane %v387, 2
      %v390 = vor.u32 %v386, %v389
      %v391 = vsel %vm365, %v381, %v390
      %v393 = vshrl.u32 %v338, 16
      %v395 = vrot.slane %v393, 1
      %v396 = vshll.u32 %v338, 16
      %v398 = vrot.slane %v396, 2
      %v399 = vor.u32 %v395, %v398
      %v400 = vsel %vm365, %v390, %v399
      %v402 = vshrl.u32 %v339, 16
      %v404 = vrot.slane %v402, 1
      %v405 = vshll.u32 %v339, 16
      %v407 = vrot.slane %v405, 2
      %v408 = vor.u32 %v404, %v407
      %v409 = vsel %vm365, %v399, %v408
      %v411 = vshrl.u32 %v364, 16
      %v413 = vrot.slane %v411, 1
      %v414 = vshll.u32 %v364, 16
      %v416 = vrot.slane %v414, 2
      %v417 = vor.u32 %v413, %v416
      %v418 = vsel %vm365, %v408, %v417
      %419 = vrot.lane.b32.xlu0 %v382, 64
      %v420 = vpop.permute.xlu0 %419
      %421 = vrot.lane.b32.xlu0 %v391, 64
      %v422 = vpop.permute.xlu0 %421
      %423 = vrot.lane.b32.xlu0 %v400, 64
      %v424 = vpop.permute.xlu0 %423
      %425 = vrot.lane.b32.xlu0 %v409, 64
      %v426 = vpop.permute.xlu0 %425
      %427 = vrot.lane.b32.xlu0 %v418, 64
      %v428 = vpop.permute.xlu0 %427
      %v430 = vunpack.c.l.b16 %v215
      %v431 = vpack.c.b16 %v233, %v430
      %vm432 = vcmask 1045504
      %v433 = vrot.slane %v431, 2
      %v434 = vrot.slane %v336, 2
      %v435 = vsel %vm432, %v433, %v434
      %v436 = vrot.slane %v337, 2
      %v437 = vsel %vm432, %v434, %v436
      %v438 = vrot.slane %v338, 2
      %v439 = vsel %vm432, %v436, %v438
      %v440 = vrot.slane %v339, 2
      %v441 = vsel %vm432, %v438, %v440
      %v442 = vrot.slane %v364, 2
      %v443 = vsel %vm432, %v440, %v442
      %444 = vrot.lane.b32.xlu0 %v435, 80
      %v445 = vpop.permute.xlu0 %444
      %446 = vrot.lane.b32.xlu0 %v437, 80
      %v447 = vpop.permute.xlu0 %446
      %448 = vrot.lane.b32.xlu0 %v439, 80
      %v449 = vpop.permute.xlu0 %448
      %450 = vrot.lane.b32.xlu0 %v441, 80
      %v451 = vpop.permute.xlu0 %450
      %452 = vrot.lane.b32.xlu0 %v443, 80
      %v453 = vpop.permute.xlu0 %452
      %v457 = vunpack.c.l.b16 %v216
      %v458 = vunpack.c.l.b16 %v217
      %v459 = vunpack.c.l.b16 %v218
      %v460 = vpack.c.b16 %v234, %v457
      %v461 = vpack.c.b16 %v458, %v333
      %v462 = vpack.c.b16 %v459, %v459
      %v463 = vrot.slane %v460, 2
      %v464 = vrot.slane %v243, 2
      %v465 = vsel %vm432, %v463, %v464
      %v466 = vrot.slane %v244, 2
      %v467 = vsel %vm432, %v464, %v466
      %v468 = vrot.slane %v245, 2
      %v469 = vsel %vm432, %v466, %v468
      %v470 = vrot.slane %v461, 2
      %v471 = vsel %vm432, %v468, %v470
      %v472 = vrot.slane %v462, 2
      %v473 = vsel %vm432, %v470, %v472
      %474 = vrot.lane.b32.xlu0 %v465, 96
      %v475 = vpop.permute.xlu0 %474
      %476 = vrot.lane.b32.xlu0 %v467, 96
      %v477 = vpop.permute.xlu0 %476
      %478 = vrot.lane.b32.xlu0 %v469, 96
      %v479 = vpop.permute.xlu0 %478
      %480 = vrot.lane.b32.xlu0 %v471, 96
      %v481 = vpop.permute.xlu0 %480
      %482 = vrot.lane.b32.xlu0 %v473, 96
      %v483 = vpop.permute.xlu0 %482
      %v485 = vunpack.c.l.b16 %v219
      %v486 = vpack.c.b16 %v485, %v485
      %vm487 = vsmask.f32 5376
      %v489 = vshrl.u32 %v460, 16
      %v491 = vrot.slane %v489, 2
      %v492 = vshll.u32 %v460, 16
      %v494 = vrot.slane %v492, 3
      %v495 = vor.u32 %v491, %v494
      %v496 = vrot.slane %v270, 2
      %v497 = vrot.slane %v266, 3
      %v498 = vor.u32 %v496, %v497
      %v499 = vsel %vm487, %v495, %v498
      %v500 = vrot.slane %v278, 2
      %v501 = vrot.slane %v274, 3
      %v502 = vor.u32 %v500, %v501
      %v503 = vsel %vm487, %v498, %v502
      %v504 = vrot.slane %v286, 2
      %v505 = vrot.slane %v282, 3
      %v506 = vor.u32 %v504, %v505
      %v507 = vsel %vm487, %v502, %v506
      %v509 = vshrl.u32 %v461, 16
      %v511 = vrot.slane %v509, 2
      %v512 = vshll.u32 %v461, 16
      %v514 = vrot.slane %v512, 3
      %v515 = vor.u32 %v511, %v514
      %v516 = vsel %vm487, %v506, %v515
      %v518 = vshrl.u32 %v486, 16
      %v520 = vrot.slane %v518, 2
      %v521 = vshll.u32 %v486, 16
      %v523 = vrot.slane %v521, 3
      %v524 = vor.u32 %v520, %v523
      %v525 = vsel %vm487, %v515, %v524
      %526 = vrot.lane.b32.xlu0 %v499, 112
      %v527 = vpop.permute.xlu0 %526
      %528 = vrot.lane.b32.xlu0 %v503, 112
      %v529 = vpop.permute.xlu0 %528
      %530 = vrot.lane.b32.xlu0 %v507, 112
      %v531 = vpop.permute.xlu0 %530
      %532 = vrot.lane.b32.xlu0 %v516, 112
      %v533 = vpop.permute.xlu0 %532
      %534 = vrot.lane.b32.xlu0 %v525, 112
      %v535 = vpop.permute.xlu0 %534
      %v537 = vunpack.c.l.b16 %v220
      %v538 = vpack.c.b16 %v234, %v537
      %vm539 = vcmask 1044480
      %v540 = vrot.slane %v538, 3
      %v541 = vrot.slane %v243, 3
      %v542 = vsel %vm539, %v540, %v541
      %v543 = vrot.slane %v244, 3
      %v544 = vsel %vm539, %v541, %v543
      %v545 = vrot.slane %v245, 3
      %v546 = vsel %vm539, %v543, %v545
      %v547 = vrot.slane %v461, 3
      %v548 = vsel %vm539, %v545, %v547
      %v549 = vrot.slane %v486, 3
      %v550 = vsel %vm539, %v547, %v549
      %vm551 = vcmask 130048
      %v553 = vsel %vm551, %v241, %v295
      %v555 = vsel %vm551, %v242, %v297
      %v557 = vsel %vm551, %v243, %v299
      %v559 = vsel %vm551, %v244, %v301
      %v561 = vsel %vm551, %v245, %v303
      %vm562 = vcmask 261120
      %v564 = vsel %vm562, %v553, %v320
      %v566 = vsel %vm562, %v555, %v322
      %v568 = vsel %vm562, %v557, %v324
      %v570 = vsel %vm562, %v559, %v326
      %v572 = vsel %vm562, %v561, %v328
      %vm573 = vcmask 392192
      %v575 = vsel %vm573, %v564, %v353
      %v577 = vsel %vm573, %v566, %v355
      %v579 = vsel %vm573, %v568, %v357
      %v581 = vsel %vm573, %v570, %v359
      %v583 = vsel %vm573, %v572, %v361
      %vm584 = vcmask 523264
      %v586 = vsel %vm584, %v575, %v420
      %v588 = vsel %vm584, %v577, %v422
      %v590 = vsel %vm584, %v579, %v424
      %v592 = vsel %vm584, %v581, %v426
      %v594 = vsel %vm584, %v583, %v428
      %vm595 = vcmask 654336
      %v597 = vsel %vm595, %v586, %v445
      %v599 = vsel %vm595, %v588, %v447
      %v601 = vsel %vm595, %v590, %v449
      %v603 = vsel %vm595, %v592, %v451
      %v605 = vsel %vm595, %v594, %v453
      %vm606 = vcmask 785408
      %v608 = vsel %vm606, %v597, %v475
      %v610 = vsel %vm606, %v599, %v477
      %v612 = vsel %vm606, %v601, %v479
      %v614 = vsel %vm606, %v603, %v481
      %v616 = vsel %vm606, %v605, %v483
      %vm617 = vcmask 916480
      %v619 = vsel %vm617, %v608, %v527
      %v622 = vsel %vm617, %v610, %v529
      %v625 = vsel %vm617, %v612, %v531
      %v628 = vsel %vm617, %v614, %v533
      %v631 = vsel %vm617, %v616, %v535
      %v633 = vld [vmem:[%s1] sm:$0xf]
      %v634 = vld [vmem:[%s1 + $0x4] sm:$0xf]
      %v635 = vld [vmem:[%s1 + $0x8] sm:$0xf]
      %v636 = vld [vmem:[%s1 + $0xc] sm:$0xf]
      %v637 = vld [vmem:[%s1 + $0x10] sm:$0xf]
      %v638 = vld [vmem:[%s1 + $0x14] sm:$0xf]
      %v639 = vld [vmem:[%s1 + $0x18] sm:$0xf]
      %v640 = vld [vmem:[%s1 + $0x1c] sm:$0xf]
      %v641 = vld [vmem:[%s1 + $0x20] sm:$0xf]
      %v642 = vld [vmem:[%s1 + $0x24] sm:$0xf]
      %v643 = vld [vmem:[%s1 + $0x28] sm:$0xf]
      %v644 = vld [vmem:[%s1 + $0x2c] sm:$0xf]
      %v645 = vld [vmem:[%s1 + $0x30] sm:$0xf]
      %v646 = vld [vmem:[%s1 + $0x34] sm:$0xf]
      %v647 = vld [vmem:[%s1 + $0x38] sm:$0xf]
      %v648 = vld [vmem:[%s1 + $0x3c] sm:$0xf]
      %v649 = vld [vmem:[%s1 + $0x40] sm:$0xf]
      %v650 = vld [vmem:[%s1 + $0x44] sm:$0xf]
      %v669 = vunpack.c.l.b16 %v633
      %v670 = vunpack.c.l.b16 %v634
      %v671 = vunpack.c.l.b16 %v635
      %v672 = vunpack.c.l.b16 %v636
      %v673 = vunpack.c.l.b16 %v637
      %v674 = vunpack.c.l.b16 %v638
      %v675 = vunpack.c.l.b16 %v639
      %v676 = vunpack.c.l.b16 %v640
      %v677 = vunpack.c.l.b16 %v641
      %v678 = vunpack.c.l.b16 %v642
      %v679 = vunpack.c.l.b16 %v643
      %v680 = vunpack.c.l.b16 %v644
      %v681 = vunpack.c.l.b16 %v645
      %v682 = vunpack.c.l.b16 %v646
      %v683 = vunpack.c.l.b16 %v647
      %v684 = vunpack.c.l.b16 %v648
      %v685 = vunpack.c.l.b16 %v649
      %v686 = vunpack.c.l.b16 %v650
      %v687 = vpack.c.b16 %v670, %v669
      %v688 = vpack.c.b16 %v672, %v671
      %v689 = vpack.c.b16 %v674, %v673
      %v690 = vpack.c.b16 %v676, %v675
      %v691 = vpack.c.b16 %v678, %v677
      %v692 = vpack.c.b16 %v680, %v679
      %v693 = vpack.c.b16 %v682, %v681
      %v694 = vpack.c.b16 %v684, %v683
      %v695 = vpack.c.b16 %v686, %v685
      %v706 = vsel %vm551, %v542, 0
      %v709 = vsel %vm551, %v544, 0
      %v712 = vsel %vm551, %v546, 0
      %v715 = vsel %vm551, %v548, 0
      %v718 = vsel %vm551, %v550, 0
      %720 = vmatprep.subr.bf16.mxu0 0
      %721 = vmatpush1.bf16.msra.mxu0 %v687
      %722 = vmatprep.subr.bf16.mxu0 0
      %723 = vmatpush1.bf16.msra.mxu0 %v688
      %724 = vmatprep.subr.bf16.mxu0 0
      %725 = vmatpush1.bf16.msra.mxu0 %v689
      %726 = vmatprep.subr.bf16.mxu0 0
      %727 = vmatpush1.bf16.msra.mxu0 %v690
      %728 = vmatprep.subr.bf16.mxu0 0
      %729 = vmatpush1.bf16.msra.mxu0 %v691
      %730 = vmatprep.subr.bf16.mxu0 0
      %731 = vmatpush1.bf16.msra.mxu0 %v692
      %732 = vmatprep.subr.bf16.mxu0 0
      %733 = vmatpush1.bf16.msra.mxu0 %v693
      %734 = vmatprep.subr.bf16.mxu0 0
      %735 = vmatpush1.bf16.msra.mxu0 %v694
      %736 = vmatprep.subr.bf16.mxu0 0
      %737 = vmatpush1.bf16.msra.mxu0 %v695
      %738 = vmatprep.subr.bf16.mxu0 0
      %739 = vmatpush1.bf16.msra.mxu0 0
      %740 = vmatprep.subr.bf16.mxu0 0
      %741 = vmatpush1.bf16.msra.mxu0 0
      %742 = vmatprep.subr.bf16.mxu0 0
      %743 = vmatpush1.bf16.msra.mxu0 0
      %744 = vmatprep.subr.bf16.mxu0 0
      %745 = vmatpush1.bf16.msra.mxu0 0
      %746 = vmatprep.subr.bf16.mxu0 0
      %747 = vmatpush1.bf16.msra.mxu0 0
      %748 = vmatprep.subr.bf16.mxu0 0
      %749 = vmatpush1.bf16.msra.mxu0 0
      %750 = vmatprep.subr.bf16.mxu0 0
      %751 = vmatpush1.bf16.msra.mxu0 0
      %752 = vmatprep.mubr.bf16.mxu0 %v706
      %753 = vmatmul.mubr.bf16.gmra.mrb[0].mxu0 %v619
      %v754 = vpop.f32.mrb[0].mxu0
      %v755 = vadd.f32 0.0, %v754
      %v756 = vpop.f32.mrb[0].mxu0
      %v757 = vpop.f32.mrb[0].mxu0
      %v758 = vadd.f32 0.0, %v757
      %v759 = vpop.f32.mrb[0].mxu0
      %760 = vmatprep.mubr.bf16.mxu0 %v709
      %761 = vmatmul.mubr.bf16.gmra.mrb[0].mxu0 %v622
      %v762 = vpop.f32.mrb[0].mxu0
      %v763 = vadd.f32 0.0, %v762
      %v764 = vpop.f32.mrb[0].mxu0
      %v765 = vpop.f32.mrb[0].mxu0
      %v766 = vadd.f32 0.0, %v765
      %v767 = vpop.f32.mrb[0].mxu0
      %768 = vmatprep.mubr.bf16.mxu0 %v712
      %769 = vmatmul.mubr.bf16.gmra.mrb[0].mxu0 %v625
      %v770 = vpop.f32.mrb[0].mxu0
      %v771 = vadd.f32 0.0, %v770
      %v772 = vpop.f32.mrb[0].mxu0
      %v773 = vpop.f32.mrb[0].mxu0
      %v774 = vadd.f32 0.0, %v773
      %v775 = vpop.f32.mrb[0].mxu0
      %776 = vmatprep.mubr.bf16.mxu0 %v715
      %777 = vmatmul.mubr.bf16.gmra.mrb[0].mxu0 %v628
      %v778 = vpop.f32.mrb[0].mxu0
      %v779 = vadd.f32 0.0, %v778
      %v780 = vpop.f32.mrb[0].mxu0
      %v781 = vpop.f32.mrb[0].mxu0
      %v782 = vadd.f32 0.0, %v781
      %v783 = vpop.f32.mrb[0].mxu0
      %784 = vmatprep.mubr.bf16.mxu0 %v718
      %785 = vmatmul.mubr.bf16.gmra.mrb[0].mxu0 %v631
      %v786 = vpop.f32.mrb[0].mxu0
      %v787 = vadd.f32 0.0, %v786
      %v788 = vpop.f32.mrb[0].mxu0
      %v789 = vpop.f32.mrb[0].mxu0
      %v790 = vadd.f32 0.0, %v789
      %v791 = vpop.f32.mrb[0].mxu0
      %792 = vdwg.mxu0
      %v793 = vld [vmem:[%s2] sm:$0x1]
      %v795 = vlaneseq
      %v796 = vshrl.u32 %v795, 7
      %v797 = vsub.s32 0, %v796
      %v798 = vrot.slane %v793, %v797
      %v800 = vmul.f32 %v755, %v798
      %v801 = vmul.f32 %v758, %v798
      %v802 = vmul.f32 %v763, %v798
      %v803 = vmul.f32 %v766, %v798
      %v804 = vmul.f32 %v771, %v798
      %v805 = vmul.f32 %v774, %v798
      %v806 = vmul.f32 %v779, %v798
      %v807 = vmul.f32 %v782, %v798
      %v808 = vmul.f32 %v787, %v798
      %v809 = vmul.f32 %v790, %v798
      %v810 = vld [vmem:[%s3] sm:$0x1]
      %v812 = vlaneseq
      %v813 = vshrl.u32 %v812, 7
      %v814 = vsub.s32 0, %v813
      %v815 = vrot.slane %v810, %v814
      %v817 = vadd.f32 %v800, %v815
      %v818 = vadd.f32 %v801, %v815
      %v819 = vadd.f32 %v802, %v815
      %v820 = vadd.f32 %v803, %v815
      %v821 = vadd.f32 %v804, %v815
      %v822 = vadd.f32 %v805, %v815
      %v823 = vadd.f32 %v806, %v815
      %v824 = vadd.f32 %v807, %v815
      %v825 = vadd.f32 %v808, %v815
      %v826 = vadd.f32 %v809, %v815
      %v827 = vmax.f32 %v817, 0.0
      %v828 = vmax.f32 %v818, 0.0
      %v829 = vmax.f32 %v819, 0.0
      %v830 = vmax.f32 %v820, 0.0
      %v831 = vmax.f32 %v821, 0.0
      %v832 = vmax.f32 %v822, 0.0
      %v833 = vmax.f32 %v823, 0.0
      %v834 = vmax.f32 %v824, 0.0
      %v835 = vmax.f32 %v825, 0.0
      %v836 = vmax.f32 %v826, 0.0
      %v837 = vpack.c.bf16 %v828, %v827
      %v838 = vpack.c.bf16 %v830, %v829
      %v839 = vpack.c.bf16 %v832, %v831
      %v840 = vpack.c.bf16 %v834, %v833
      %v841 = vpack.c.bf16 %v836, %v835
      %v847 = vunpack.c.l.b16 %v837
      %v848 = vunpack.c.h.b16 %v837
      %v849 = vunpack.c.l.b16 %v838
      %v850 = vunpack.c.h.b16 %v838
      %v851 = vunpack.c.l.b16 %v839
      %v852 = vunpack.c.h.b16 %v839
      %v853 = vunpack.c.l.b16 %v840
      %v854 = vunpack.c.h.b16 %v840
      %v855 = vunpack.c.l.b16 %v841
      %v856 = vunpack.c.h.b16 %v841
      %v857 = vpack.c.b16 %v847, %v847
      %v858 = vpack.c.b16 %v848, %v848
      %v859 = vpack.c.b16 %v849, %v849
      %v860 = vpack.c.b16 %v850, %v850
      %v861 = vpack.c.b16 %v851, %v851
      %v862 = vpack.c.b16 %v852, %v852
      %v863 = vpack.c.b16 %v853, %v853
      %v864 = vpack.c.b16 %v854, %v854
      %v865 = vpack.c.b16 %v855, %v855
      %v866 = vpack.c.b16 %v856, %v856
      %vm877 = vcmask 257024
      %878 = vst.msk [vmem:[%s197] sm:$0xf] %vm877, %v857
      %879 = vst.msk [vmem:[%s197 + $0x4] sm:$0xf] %vm877, %v858
      %880 = vst.msk [vmem:[%s197 + $0x8] sm:$0xf] %vm877, %v859
      %881 = vst.msk [vmem:[%s197 + $0xc] sm:$0xf] %vm877, %v860
      %882 = vst.msk [vmem:[%s197 + $0x10] sm:$0xf] %vm877, %v861
      %883 = vst.msk [vmem:[%s197 + $0x14] sm:$0xf] %vm877, %v862
      %884 = vst.msk [vmem:[%s197 + $0x18] sm:$0xf] %vm877, %v863
      %885 = vst.msk [vmem:[%s197 + $0x1c] sm:$0xf] %vm877, %v864
      %886 = vst.msk [vmem:[%s197 + $0x20] sm:$0xf] %vm877, %v865
      %887 = vst.msk [vmem:[%s197 + $0x24] sm:$0xf] %vm877, %v866
      %p888 = scmp.lt.s32.totalorder %s15, 1
      %s889 = scalar_select %p888, %s15, 1
      %s890 = smul.addr %s889, 10
      %s891 = smul.addr %s890, 4
      %s892 = scalar_lea.vmem %s4, %s891
      // Predicated region
      $region37: #{cifar_se_basic_block.2} parent=35 // pred_check
        %p893 = pneg %p122
      $region38: #{cifar_se_basic_block.2} parent=35 // pred_check_branch
        %895 = sbr.rel (%p893) target = $region40
      $region39: #{cifar_se_basic_block.2} parent=35 // pred_region
        _
      $region40: #{cifar_se_basic_block.2} parent=35 // pred_fallthru
        _
    $region36: #{cifar_se_basic_block.2} parent=5 // pred_fallthru
      _
    %p896 = scmp.le.s32.totalorder 2, %s10
    // Predicated region
    $region41: #{cifar_se_basic_block.2} parent=5 // pred_check
      %p897 = pneg %p896
    $region42: #{cifar_se_basic_block.2} parent=5 // pred_check_branch
      %899 = sbr.rel (%p897) target = $region44
    $region43: #{cifar_se_basic_block.2} parent=5 // pred_region
      %s900 = ssub.s32 %s10, 2
      // Predicated region
      $region45: #{cifar_se_basic_block.2} parent=43 // pred_check
        %p901 = pneg %p128
      $region46: #{cifar_se_basic_block.2} parent=43 // pred_check_branch
        %903 = sbr.rel (%p901) target = $region48
      $region47: #{cifar_se_basic_block.2} parent=43 // pred_region
        %p904 = scmp.lt.s32.totalorder %s16, 1
        %s905 = scalar_select %p904, %s16, 1
        %s906 = smul.addr %s905, 10
        %s907 = smul.addr %s906, 4
        %s908 = scalar_lea.vmem %s4, %s907
      $region48: #{cifar_se_basic_block.2} parent=43 // pred_fallthru
        _
    $region44: #{cifar_se_basic_block.2} parent=5 // pred_fallthru
      _
  $region6: #{cifar_se_basic_block.2} parent=0 // loop_footer
    %s14 = sadd.s32 1, %s10
  $region7: #{cifar_se_basic_block.2} parent=0 // loop_footer_branch
    %9 = sbr.rel target = $region3
  $region8: #{cifar_se_basic_block.2} parent=0 // loop_exit
    _

// kernel: cifar_se_basic_block.3
$region0: #{cifar_se_basic_block.3}
  #allocation0 [shape = 'u32[]', space=smem, size = 0x4, offset = 0x4, fixed_abs, tag = 'smem constant byte address 0x4 - core index']
  #allocation1 [shape = 'u32[144,128]{1,0:T(1,128)}', space=vmem, size = 0x12000, scoped, tag = 'internal scratch']
  %s0 = inlined_call_operand.vmem [shape: bf16[2,102,32], index: 0, kind: input, shape index: {}]
  %s1 = inlined_call_operand.vmem [shape: bf16[2,80,16], index: 1, kind: input, shape index: {}]
  %s2 = inlined_call_operand.vmem [shape: bf16[288,32], index: 2, kind: input, shape index: {}]
  %s3 = inlined_call_operand.vmem [shape: f32[1,32], index: 3, kind: input, shape index: {}]
  %s4 = inlined_call_operand.vmem [shape: f32[1,32], index: 4, kind: input, shape index: {}]
  %s5 = inlined_call_operand.vmem [shape: f32[80,1], index: 5, kind: input, shape index: {}]
  %s6 = inlined_call_operand.vmem [shape: bf16[16,32], index: 6, kind: input, shape index: {}]
  %s7 = inlined_call_operand.vmem [shape: f32[1,32], index: 7, kind: input, shape index: {}]
  %s8 = inlined_call_operand.vmem [shape: f32[1,32], index: 8, kind: input, shape index: {}]
  %s9 = inlined_call_operand.vmem [shape: f32[32,8], index: 9, kind: input, shape index: {}]
  %s10 = inlined_call_operand.vmem [shape: f32[1,8], index: 10, kind: input, shape index: {}]
  %s11 = inlined_call_operand.vmem [shape: f32[8,32], index: 11, kind: input, shape index: {}]
  %s12 = inlined_call_operand.vmem [shape: f32[1,32], index: 12, kind: input, shape index: {}]
  %s13 = inlined_call_operand.vmem [shape: bf16[2,80,32], index: 13, kind: output, shape index: {}]
  %s14 = sld [smem:[#allocation0]]
  $region85: #{cifar_se_basic_block.3} parent=0
    _
  %s16 = ssub.s32 1, %s14
  %s17 = scalar_select 0, %s16, %s14
  loop: start=0, step=1, limit=4
  $region2: #{cifar_se_basic_block.3} parent=0 // loop_pre_header
    _
  $region3: #{cifar_se_basic_block.3} parent=0 // loop_header
    %s19 = sphi 0, %s23
    %p20 = scmp.ge.s32.totalorder %s19, 4
    %s29 = sphi 0, %s31
    %s32 = sphi 0, %s29
    %s33 = sphi 0, %s32
    %s49 = sphi 0, %s33
    %s55 = sphi 0, %s57
    %s58 = sphi 0, %s55
    %s59 = sphi 0, %s58
    %s75 = sphi 0, %s59
    %s79 = sphi 0, %s79
    %s81 = sphi 0, %s79
    %s82 = sphi 0, %s81
    %s96 = sphi 0, %s82
    %s100 = sphi 0, %s100
    %s102 = sphi 0, %s100
    %s103 = sphi 0, %s102
    %s117 = sphi 0, %s103
    %s121 = sphi 0, %s121
    %s123 = sphi 0, %s121
    %s124 = sphi 0, %s123
    %s138 = sphi 0, %s124
    %s142 = sphi 0, %s142
    %s144 = sphi 0, %s142
    %s145 = sphi 0, %s144
    %s159 = sphi 0, %s145
    %s163 = sphi 0, %s163
    %s165 = sphi 0, %s163
    %s166 = sphi 0, %s165
    %s180 = sphi 0, %s166
    %s184 = sphi 0, %s184
    %s186 = sphi 0, %s184
    %s187 = sphi 0, %s186
    %s201 = sphi 0, %s187
    %s205 = sphi 0, %s205
    %s207 = sphi 0, %s205
    %s208 = sphi 0, %s207
    %s222 = sphi 0, %s208
    %s226 = sphi 0, %s226
    %s228 = sphi 0, %s226
    %s229 = sphi 0, %s228
    %s243 = sphi 0, %s229
    %s247 = sphi 0, %s247
    %s249 = sphi 0, %s247
    %s250 = sphi 0, %s249
    %s264 = sphi 0, %s250
    %s268 = sphi 0, %s268
    %s270 = sphi 0, %s268
    %s271 = sphi 0, %s270
    %s285 = sphi 0, %s271
    %s289 = sphi 0, %s289
    %s291 = sphi 0, %s289
    %s292 = sphi 0, %s291
    %s306 = sphi 0, %s292
    %s312 = sphi 0, %s314
    %s315 = sphi 0, %s312
    %s316 = sphi 0, %s315
    %s332 = sphi 0, %s316
  $region4: #{cifar_se_basic_block.3} parent=0 // loop_header_branch
    %22 = sbr.rel (%p20) target = $region8
  $region5: #{cifar_se_basic_block.3} parent=0 // loop_body
    %s24 = ssub.s32 %s19, 1
    %s25 = ssub.s32 %s19, 2
    %s26 = sadd.s32 %s19, 1
    %s27 = ssub.s32 %s19, %s26
    %p28 = scmp.eq.s32.totalorder %s27, 0
    %s30 = sadd.s32 %s29, 1
    %s31 = scalar_select %p28, %s29, %s30
    %p34 = pneg %p28
    %p35 = scmp.eq.s32.totalorder %s19, 1
    %p36 = por %p34, %p35
    %p37 = scmp.ne.s32.totalorder %s29, %s32
    %p38 = scmp.eq.s32.totalorder %s19, 0
    %p39 = por %p37, %p38
    %p40 = scmp.ne.s32.totalorder %s29, %s32
    %p41 = scmp.eq.s32.totalorder %s24, 1
    %p42 = por %p40, %p41
    %p43 = scmp.ne.s32.totalorder %s32, %s33
    %p44 = scmp.eq.s32.totalorder %s24, 0
    %p45 = por %p43, %p44
    %p46 = scmp.ne.s32.totalorder %s32, %s33
    %p47 = scmp.eq.s32.totalorder %s25, 1
    %p48 = por %p46, %p47
    %p50 = scmp.ne.s32.totalorder %s33, %s49
    %p51 = scmp.eq.s32.totalorder %s25, 0
    %p52 = por %p50, %p51
    %s53 = ssub.s32 %s19, %s26
    %p54 = scmp.eq.s32.totalorder %s53, 0
    %s56 = sadd.s32 %s55, 1
    %s57 = scalar_select %p54, %s55, %s56
    %p60 = pneg %p54
    %p61 = scmp.eq.s32.totalorder %s19, 1
    %p62 = por %p60, %p61
    %p63 = scmp.ne.s32.totalorder %s55, %s58
    %p64 = scmp.eq.s32.totalorder %s19, 0
    %p65 = por %p63, %p64
    %p66 = scmp.ne.s32.totalorder %s55, %s58
    %p67 = scmp.eq.s32.totalorder %s24, 1
    %p68 = por %p66, %p67
    %p69 = scmp.ne.s32.totalorder %s58, %s59
    %p70 = scmp.eq.s32.totalorder %s24, 0
    %p71 = por %p69, %p70
    %p72 = scmp.ne.s32.totalorder %s58, %s59
    %p73 = scmp.eq.s32.totalorder %s25, 1
    %p74 = por %p72, %p73
    %p76 = scmp.ne.s32.totalorder %s59, %s75
    %p77 = scmp.eq.s32.totalorder %s25, 0
    %p78 = por %p76, %p77
    %s80 = sadd.s32 %s79, 1
    %p83 = scmp.eq.s32.totalorder %s19, 1
    %p84 = scmp.ne.s32.totalorder %s79, %s81
    %p85 = scmp.eq.s32.totalorder %s19, 0
    %p86 = por %p84, %p85
    %p87 = scmp.ne.s32.totalorder %s79, %s81
    %p88 = scmp.eq.s32.totalorder %s24, 1
    %p89 = por %p87, %p88
    %p90 = scmp.ne.s32.totalorder %s81, %s82
    %p91 = scmp.eq.s32.totalorder %s24, 0
    %p92 = por %p90, %p91
    %p93 = scmp.ne.s32.totalorder %s81, %s82
    %p94 = scmp.eq.s32.totalorder %s25, 1
    %p95 = por %p93, %p94
    %p97 = scmp.ne.s32.totalorder %s82, %s96
    %p98 = scmp.eq.s32.totalorder %s25, 0
    %p99 = por %p97, %p98
    %s101 = sadd.s32 %s100, 1
    %p104 = scmp.eq.s32.totalorder %s19, 1
    %p105 = scmp.ne.s32.totalorder %s100, %s102
    %p106 = scmp.eq.s32.totalorder %s19, 0
    %p107 = por %p105, %p106
    %p108 = scmp.ne.s32.totalorder %s100, %s102
    %p109 = scmp.eq.s32.totalorder %s24, 1
    %p110 = por %p108, %p109
    %p111 = scmp.ne.s32.totalorder %s102, %s103
    %p112 = scmp.eq.s32.totalorder %s24, 0
    %p113 = por %p111, %p112
    %p114 = scmp.ne.s32.totalorder %s102, %s103
    %p115 = scmp.eq.s32.totalorder %s25, 1
    %p116 = por %p114, %p115
    %p118 = scmp.ne.s32.totalorder %s103, %s117
    %p119 = scmp.eq.s32.totalorder %s25, 0
    %p120 = por %p118, %p119
    %s122 = sadd.s32 %s121, 1
    %p125 = scmp.eq.s32.totalorder %s19, 1
    %p126 = scmp.ne.s32.totalorder %s121, %s123
    %p127 = scmp.eq.s32.totalorder %s19, 0
    %p128 = por %p126, %p127
    %p129 = scmp.ne.s32.totalorder %s121, %s123
    %p130 = scmp.eq.s32.totalorder %s24, 1
    %p131 = por %p129, %p130
    %p132 = scmp.ne.s32.totalorder %s123, %s124
    %p133 = scmp.eq.s32.totalorder %s24, 0
    %p134 = por %p132, %p133
    %p135 = scmp.ne.s32.totalorder %s123, %s124
    %p136 = scmp.eq.s32.totalorder %s25, 1
    %p137 = por %p135, %p136
    %p139 = scmp.ne.s32.totalorder %s124, %s138
    %p140 = scmp.eq.s32.totalorder %s25, 0
    %p141 = por %p139, %p140
    %s143 = sadd.s32 %s142, 1
    %p146 = scmp.eq.s32.totalorder %s19, 1
    %p147 = scmp.ne.s32.totalorder %s142, %s144
    %p148 = scmp.eq.s32.totalorder %s19, 0
    %p149 = por %p147, %p148
    %p150 = scmp.ne.s32.totalorder %s142, %s144
    %p151 = scmp.eq.s32.totalorder %s24, 1
    %p152 = por %p150, %p151
    %p153 = scmp.ne.s32.totalorder %s144, %s145
    %p154 = scmp.eq.s32.totalorder %s24, 0
    %p155 = por %p153, %p154
    %p156 = scmp.ne.s32.totalorder %s144, %s145
    %p157 = scmp.eq.s32.totalorder %s25, 1
    %p158 = por %p156, %p157
    %p160 = scmp.ne.s32.totalorder %s145, %s159
    %p161 = scmp.eq.s32.totalorder %s25, 0
    %p162 = por %p160, %p161
    %s164 = sadd.s32 %s163, 1
    %p167 = scmp.eq.s32.totalorder %s19, 1
    %p168 = scmp.ne.s32.totalorder %s163, %s165
    %p169 = scmp.eq.s32.totalorder %s19, 0
    %p170 = por %p168, %p169
    %p171 = scmp.ne.s32.totalorder %s163, %s165
    %p172 = scmp.eq.s32.totalorder %s24, 1
    %p173 = por %p171, %p172
    %p174 = scmp.ne.s32.totalorder %s165, %s166
    %p175 = scmp.eq.s32.totalorder %s24, 0
    %p176 = por %p174, %p175
    %p177 = scmp.ne.s32.totalorder %s165, %s166
    %p178 = scmp.eq.s32.totalorder %s25, 1
    %p179 = por %p177, %p178
    %p181 = scmp.ne.s32.totalorder %s166, %s180
    %p182 = scmp.eq.s32.totalorder %s25, 0
    %p183 = por %p181, %p182
    %s185 = sadd.s32 %s184, 1
    %p188 = scmp.eq.s32.totalorder %s19, 1
    %p189 = scmp.ne.s32.totalorder %s184, %s186
    %p190 = scmp.eq.s32.totalorder %s19, 0
    %p191 = por %p189, %p190
    %p192 = scmp.ne.s32.totalorder %s184, %s186
    %p193 = scmp.eq.s32.totalorder %s24, 1
    %p194 = por %p192, %p193
    %p195 = scmp.ne.s32.totalorder %s186, %s187
    %p196 = scmp.eq.s32.totalorder %s24, 0
    %p197 = por %p195, %p196
    %p198 = scmp.ne.s32.totalorder %s186, %s187
    %p199 = scmp.eq.s32.totalorder %s25, 1
    %p200 = por %p198, %p199
    %p202 = scmp.ne.s32.totalorder %s187, %s201
    %p203 = scmp.eq.s32.totalorder %s25, 0
    %p204 = por %p202, %p203
    %s206 = sadd.s32 %s205, 1
    %p209 = scmp.eq.s32.totalorder %s19, 1
    %p210 = scmp.ne.s32.totalorder %s205, %s207
    %p211 = scmp.eq.s32.totalorder %s19, 0
    %p212 = por %p210, %p211
    %p213 = scmp.ne.s32.totalorder %s205, %s207
    %p214 = scmp.eq.s32.totalorder %s24, 1
    %p215 = por %p213, %p214
    %p216 = scmp.ne.s32.totalorder %s207, %s208
    %p217 = scmp.eq.s32.totalorder %s24, 0
    %p218 = por %p216, %p217
    %p219 = scmp.ne.s32.totalorder %s207, %s208
    %p220 = scmp.eq.s32.totalorder %s25, 1
    %p221 = por %p219, %p220
    %p223 = scmp.ne.s32.totalorder %s208, %s222
    %p224 = scmp.eq.s32.totalorder %s25, 0
    %p225 = por %p223, %p224
    %s227 = sadd.s32 %s226, 1
    %p230 = scmp.eq.s32.totalorder %s19, 1
    %p231 = scmp.ne.s32.totalorder %s226, %s228
    %p232 = scmp.eq.s32.totalorder %s19, 0
    %p233 = por %p231, %p232
    %p234 = scmp.ne.s32.totalorder %s226, %s228
    %p235 = scmp.eq.s32.totalorder %s24, 1
    %p236 = por %p234, %p235
    %p237 = scmp.ne.s32.totalorder %s228, %s229
    %p238 = scmp.eq.s32.totalorder %s24, 0
    %p239 = por %p237, %p238
    %p240 = scmp.ne.s32.totalorder %s228, %s229
    %p241 = scmp.eq.s32.totalorder %s25, 1
    %p242 = por %p240, %p241
    %p244 = scmp.ne.s32.totalorder %s229, %s243
    %p245 = scmp.eq.s32.totalorder %s25, 0
    %p246 = por %p244, %p245
    %s248 = sadd.s32 %s247, 1
    %p251 = scmp.eq.s32.totalorder %s19, 1
    %p252 = scmp.ne.s32.totalorder %s247, %s249
    %p253 = scmp.eq.s32.totalorder %s19, 0
    %p254 = por %p252, %p253
    %p255 = scmp.ne.s32.totalorder %s247, %s249
    %p256 = scmp.eq.s32.totalorder %s24, 1
    %p257 = por %p255, %p256
    %p258 = scmp.ne.s32.totalorder %s249, %s250
    %p259 = scmp.eq.s32.totalorder %s24, 0
    %p260 = por %p258, %p259
    %p261 = scmp.ne.s32.totalorder %s249, %s250
    %p262 = scmp.eq.s32.totalorder %s25, 1
    %p263 = por %p261, %p262
    %p265 = scmp.ne.s32.totalorder %s250, %s264
    %p266 = scmp.eq.s32.totalorder %s25, 0
    %p267 = por %p265, %p266
    %s269 = sadd.s32 %s268, 1
    %p272 = scmp.eq.s32.totalorder %s19, 1
    %p273 = scmp.ne.s32.totalorder %s268, %s270
    %p274 = scmp.eq.s32.totalorder %s19, 0
    %p275 = por %p273, %p274
    %p276 = scmp.ne.s32.totalorder %s268, %s270
    %p277 = scmp.eq.s32.totalorder %s24, 1
    %p278 = por %p276, %p277
    %p279 = scmp.ne.s32.totalorder %s270, %s271
    %p280 = scmp.eq.s32.totalorder %s24, 0
    %p281 = por %p279, %p280
    %p282 = scmp.ne.s32.totalorder %s270, %s271
    %p283 = scmp.eq.s32.totalorder %s25, 1
    %p284 = por %p282, %p283
    %p286 = scmp.ne.s32.totalorder %s271, %s285
    %p287 = scmp.eq.s32.totalorder %s25, 0
    %p288 = por %p286, %p287
    %s290 = sadd.s32 %s289, 1
    %p293 = scmp.eq.s32.totalorder %s19, 1
    %p294 = scmp.ne.s32.totalorder %s289, %s291
    %p295 = scmp.eq.s32.totalorder %s19, 0
    %p296 = por %p294, %p295
    %p297 = scmp.ne.s32.totalorder %s289, %s291
    %p298 = scmp.eq.s32.totalorder %s24, 1
    %p299 = por %p297, %p298
    %p300 = scmp.ne.s32.totalorder %s291, %s292
    %p301 = scmp.eq.s32.totalorder %s24, 0
    %p302 = por %p300, %p301
    %p303 = scmp.ne.s32.totalorder %s291, %s292
    %p304 = scmp.eq.s32.totalorder %s25, 1
    %p305 = por %p303, %p304
    %p307 = scmp.ne.s32.totalorder %s292, %s306
    %p308 = scmp.eq.s32.totalorder %s25, 0
    %p309 = por %p307, %p308
    %s310 = ssub.s32 %s19, %s26
    %p311 = scmp.eq.s32.totalorder %s310, 0
    %s313 = sadd.s32 %s312, 1
    %s314 = scalar_select %p311, %s312, %s313
    %p317 = pneg %p311
    %p318 = scmp.eq.s32.totalorder %s19, 1
    %p319 = por %p317, %p318
    %p320 = scmp.ne.s32.totalorder %s312, %s315
    %p321 = scmp.eq.s32.totalorder %s19, 0
    %p322 = por %p320, %p321
    %p323 = scmp.ne.s32.totalorder %s312, %s315
    %p324 = scmp.eq.s32.totalorder %s24, 1
    %p325 = por %p323, %p324
    %p326 = scmp.ne.s32.totalorder %s315, %s316
    %p327 = scmp.eq.s32.totalorder %s24, 0
    %p328 = por %p326, %p327
    %p329 = scmp.ne.s32.totalorder %s315, %s316
    %p330 = scmp.eq.s32.totalorder %s25, 1
    %p331 = por %p329, %p330
    %p333 = scmp.ne.s32.totalorder %s316, %s332
    %p334 = scmp.eq.s32.totalorder %s25, 0
    %p335 = por %p333, %p334
    %p336 = scmp.le.s32.totalorder 1, %s19
    %p337 = scmp.lt.s32.totalorder %s19, 3
    %p338 = pnand %p336, %p337
    %p339 = pneg %p338
    // Predicated region
    $region9: #{cifar_se_basic_block.3} parent=5 // pred_check
      _
    $region10: #{cifar_se_basic_block.3} parent=5 // pred_check_branch
      %341 = sbr.rel (%p338) target = $region12
    $region11: #{cifar_se_basic_block.3} parent=5 // pred_region
      %s342 = ssub.s32 %s19, 1
      // Predicated region
      $region13: #{cifar_se_basic_block.3} parent=11 // pred_check
        %p343 = pneg %p92
      $region14: #{cifar_se_basic_block.3} parent=11 // pred_check_branch
        %345 = sbr.rel (%p343) target = $region16
      $region15: #{cifar_se_basic_block.3} parent=11 // pred_region
        _
      $region16: #{cifar_se_basic_block.3} parent=11 // pred_fallthru
        _
      // Predicated region
      $region17: #{cifar_se_basic_block.3} parent=11 // pred_check
        %p346 = pneg %p113
      $region18: #{cifar_se_basic_block.3} parent=11 // pred_check_branch
        %348 = sbr.rel (%p346) target = $region20
      $region19: #{cifar_se_basic_block.3} parent=11 // pred_region
        _
      $region20: #{cifar_se_basic_block.3} parent=11 // pred_fallthru
        _
      // Predicated region
      $region21: #{cifar_se_basic_block.3} parent=11 // pred_check
        %p349 = pneg %p134
      $region22: #{cifar_se_basic_block.3} parent=11 // pred_check_branch
        %351 = sbr.rel (%p349) target = $region24
      $region23: #{cifar_se_basic_block.3} parent=11 // pred_region
        _
      $region24: #{cifar_se_basic_block.3} parent=11 // pred_fallthru
        _
      // Predicated region
      $region25: #{cifar_se_basic_block.3} parent=11 // pred_check
        %p352 = pneg %p155
      $region26: #{cifar_se_basic_block.3} parent=11 // pred_check_branch
        %354 = sbr.rel (%p352) target = $region28
      $region27: #{cifar_se_basic_block.3} parent=11 // pred_region
        _
      $region28: #{cifar_se_basic_block.3} parent=11 // pred_fallthru
        _
      // Predicated region
      $region29: #{cifar_se_basic_block.3} parent=11 // pred_check
        %p355 = pneg %p176
      $region30: #{cifar_se_basic_block.3} parent=11 // pred_check_branch
        %357 = sbr.rel (%p355) target = $region32
      $region31: #{cifar_se_basic_block.3} parent=11 // pred_region
        _
      $region32: #{cifar_se_basic_block.3} parent=11 // pred_fallthru
        _
      // Predicated region
      $region33: #{cifar_se_basic_block.3} parent=11 // pred_check
        %p358 = pneg %p197
      $region34: #{cifar_se_basic_block.3} parent=11 // pred_check_branch
        %360 = sbr.rel (%p358) target = $region36
      $region35: #{cifar_se_basic_block.3} parent=11 // pred_region
        _
      $region36: #{cifar_se_basic_block.3} parent=11 // pred_fallthru
        _
      // Predicated region
      $region37: #{cifar_se_basic_block.3} parent=11 // pred_check
        %p361 = pneg %p218
      $region38: #{cifar_se_basic_block.3} parent=11 // pred_check_branch
        %363 = sbr.rel (%p361) target = $region40
      $region39: #{cifar_se_basic_block.3} parent=11 // pred_region
        _
      $region40: #{cifar_se_basic_block.3} parent=11 // pred_fallthru
        _
      // Predicated region
      $region41: #{cifar_se_basic_block.3} parent=11 // pred_check
        %p364 = pneg %p239
      $region42: #{cifar_se_basic_block.3} parent=11 // pred_check_branch
        %366 = sbr.rel (%p364) target = $region44
      $region43: #{cifar_se_basic_block.3} parent=11 // pred_region
        _
      $region44: #{cifar_se_basic_block.3} parent=11 // pred_fallthru
        _
      // Predicated region
      $region45: #{cifar_se_basic_block.3} parent=11 // pred_check
        %p367 = pneg %p260
      $region46: #{cifar_se_basic_block.3} parent=11 // pred_check_branch
        %369 = sbr.rel (%p367) target = $region48
      $region47: #{cifar_se_basic_block.3} parent=11 // pred_region
        _
      $region48: #{cifar_se_basic_block.3} parent=11 // pred_fallthru
        _
      // Predicated region
      $region49: #{cifar_se_basic_block.3} parent=11 // pred_check
        %p370 = pneg %p281
      $region50: #{cifar_se_basic_block.3} parent=11 // pred_check_branch
        %372 = sbr.rel (%p370) target = $region52
      $region51: #{cifar_se_basic_block.3} parent=11 // pred_region
        _
      $region52: #{cifar_se_basic_block.3} parent=11 // pred_fallthru
        _
      // Predicated region
      $region53: #{cifar_se_basic_block.3} parent=11 // pred_check
        %p373 = pneg %p302
      $region54: #{cifar_se_basic_block.3} parent=11 // pred_check_branch
        %375 = sbr.rel (%p373) target = $region56
      $region55: #{cifar_se_basic_block.3} parent=11 // pred_region
        _
      $region56: #{cifar_se_basic_block.3} parent=11 // pred_fallthru
        _
    $region12: #{cifar_se_basic_block.3} parent=5 // pred_fallthru
      _
    %p376 = scmp.lt.s32.totalorder %s19, 2
    // Predicated region
    $region57: #{cifar_se_basic_block.3} parent=5 // pred_check
      %p377 = pneg %p376
    $region58: #{cifar_se_basic_block.3} parent=5 // pred_check_branch
      %379 = sbr.rel (%p377) target = $region60
    $region59: #{cifar_se_basic_block.3} parent=5 // pred_region
      // Predicated region
      $region61: #{cifar_se_basic_block.3} parent=59 // pred_check
        %p380 = pneg %p39
      $region62: #{cifar_se_basic_block.3} parent=59 // pred_check_branch
        %382 = sbr.rel (%p380) target = $region64
      $region63: #{cifar_se_basic_block.3} parent=59 // pred_region
        %p383 = scmp.lt.s32.totalorder %s19, 1
        %s384 = scalar_select %p383, %s19, 1
        %s385 = smul.addr %s384, 13
        %s386 = smul.addr %s385, 4
        %s387 = scalar_lea.vmem %s0, %s386
      $region64: #{cifar_se_basic_block.3} parent=59 // pred_fallthru
        _
      // Predicated region
      $region65: #{cifar_se_basic_block.3} parent=59 // pred_check
        %p388 = pneg %p65
      $region66: #{cifar_se_basic_block.3} parent=59 // pred_check_branch
        %390 = sbr.rel (%p388) target = $region68
      $region67: #{cifar_se_basic_block.3} parent=59 // pred_region
        %p391 = scmp.lt.s32.totalorder %s19, 1
        %s392 = scalar_select %p391, %s19, 1
        %s393 = smul.addr %s392, 10
        %s394 = smul.addr %s393, 4
        %s395 = scalar_lea.vmem %s1, %s394
      $region68: #{cifar_se_basic_block.3} parent=59 // pred_fallthru
        _
    $region60: #{cifar_se_basic_block.3} parent=5 // pred_fallthru
      _
    %p396 = scmp.le.s32.totalorder 1, %s19
    %p397 = scmp.lt.s32.totalorder %s19, 3
    %p398 = pnand %p396, %p397
    %p399 = pneg %p398
    // Predicated region
    $region69: #{cifar_se_basic_block.3} parent=5 // pred_check
      _
    $region70: #{cifar_se_basic_block.3} parent=5 // pred_check_branch
      %401 = sbr.rel (%p398) target = $region72
    $region71: #{cifar_se_basic_block.3} parent=5 // pred_region
      %s402 = ssub.s32 %s19, 1
      %p403 = scmp.lt.s32.totalorder %s24, 1
      %s404 = scalar_select %p403, %s24, 1
      %s405 = smul.addr %s404, 13
      %s406 = smul.addr %s405, 4
      %s407 = scalar_lea.vmem %s0, %s406
      %p408 = pneg %p45
      %p409 = pneg %p42
      %p410 = scmp.lt.s32.totalorder %s24, 1
      %s411 = scalar_select %p410, %s24, 1
      %s412 = smul.addr %s411, 10
      %s413 = smul.addr %s412, 4
      %s414 = scalar_lea.vmem %s1, %s413
      %p415 = pneg %p71
      %p416 = pneg %p68
      %p417 = pneg %p92
      %p418 = pneg %p89
      %p419 = pneg %p113
      %p420 = pneg %p110
      %p421 = pneg %p134
      %p422 = pneg %p131
      %p423 = pneg %p155
      %p424 = pneg %p152
      %p425 = pneg %p176
      %p426 = pneg %p173
      %p427 = pneg %p197
      %p428 = pneg %p194
      %p429 = pneg %p218
      %p430 = pneg %p215
      %p431 = pneg %p239
      %p432 = pneg %p236
      %p433 = pneg %p260
      %p434 = pneg %p257
      %p435 = pneg %p281
      %p436 = pneg %p278
      %p437 = pneg %p302
      %p438 = pneg %p299
      %p439 = pneg %p328
      %p440 = pneg %p325
      %p441 = scmp.lt.s32.totalorder %s24, 1
      %s442 = scalar_select %p441, %s24, 1
      %s443 = smul.addr %s442, 10
      %s444 = smul.addr %s443, 4
      %s445 = scalar_lea.vmem %s13, %s444
      %p446 = scmp.lt.s32.totalorder %s24, 1
      %s447 = scalar_select %p446, %s24, 1
      %s448 = smul.addr %s447, 13
      %s449 = smul.addr %s448, 4
      %s450 = scalar_lea.vmem %s0, %s449
      %p451 = scmp.lt.s32.totalorder %s24, 1
      %s452 = scalar_select %p451, %s24, 1
      %s453 = smul.addr %s452, 10
      %s454 = smul.addr %s453, 4
      %s455 = scalar_lea.vmem %s1, %s454
      %p456 = scmp.lt.s32.totalorder %s24, 1
      %s457 = scalar_select %p456, %s24, 1
      %s458 = smul.addr %s457, 10
      %s459 = smul.addr %s458, 4
      %s460 = scalar_lea.vmem %s13, %s459
      %v462 = vld [vmem:[%s450] sm:$0xf]
      %v463 = vld [vmem:[%s450 + $0x4] sm:$0xf]
      %v464 = vld [vmem:[%s450 + $0x8] sm:$0xf]
      %v465 = vld [vmem:[%s450 + $0xc] sm:$0xf]
      %v466 = vld [vmem:[%s450 + $0x10] sm:$0xf]
      %v467 = vld [vmem:[%s450 + $0x14] sm:$0xf]
      %v468 = vld [vmem:[%s450 + $0x18] sm:$0xf]
      %v469 = vld [vmem:[%s450 + $0x1c] sm:$0xf]
      %v470 = vld [vmem:[%s450 + $0x20] sm:$0xf]
      %v471 = vld [vmem:[%s450 + $0x24] sm:$0xf]
      %v472 = vld [vmem:[%s450 + $0x28] sm:$0x1]
      %v473 = vld [vmem:[%s450] sm:$0xe]
      %v474 = vld [vmem:[%s450 + $0x4] sm:$0xe]
      %v475 = vld [vmem:[%s450 + $0x28] sm:$0xf]
      %v476 = vld [vmem:[%s450 + $0x2c] sm:$0x1]
      %v477 = vld [vmem:[%s450 + $0x2c] sm:$0x3]
      %v478 = vld [vmem:[%s450 + $0x4] sm:$0xc]
      %v479 = vld [vmem:[%s450 + $0x8] sm:$0xc]
      %v480 = vld [vmem:[%s450 + $0x2c] sm:$0xf]
      %v481 = vld [vmem:[%s450 + $0x30] sm:$0x3]
      %v482 = vld [vmem:[%s450 + $0x30] sm:$0x7]
      %v483 = vld [vmem:[%s450 + $0x8] sm:$0x8]
      %v494 = vunpack.c.l.b16 %v462
      %v495 = vunpack.c.l.b16 %v463
      %v496 = vunpack.c.l.b16 %v464
      %v497 = vunpack.c.l.b16 %v465
      %v498 = vunpack.c.l.b16 %v466
      %v499 = vunpack.c.l.b16 %v467
      %v500 = vunpack.c.l.b16 %v468
      %v501 = vunpack.c.l.b16 %v469
      %v502 = vunpack.c.l.b16 %v470
      %v503 = vunpack.c.l.b16 %v471
      %v504 = vpack.c.b16 %v495, %v494
      %v505 = vpack.c.b16 %v497, %v496
      %v506 = vpack.c.b16 %v499, %v498
      %v507 = vpack.c.b16 %v501, %v500
      %v508 = vpack.c.b16 %v503, %v502
      %v510 = vunpack.c.l.b16 %v472
      %v511 = vpack.c.b16 %v510, %v510
      %vm512 = vsmask.f32 7424
      %v514 = vshrl.u32 %v504, 16
      %v516 = vshll.u32 %v504, 16
      %v518 = vrot.slane %v516, 1
      %v519 = vor.u32 %v514, %v518
      %v521 = vshll.u32 %v505, 16
      %v523 = vrot.slane %v521, 1
      %v524 = vsel %vm512, %v519, %v523
      %v525 = vshrl.u32 %v505, 16
      %v527 = vor.u32 %v525, %v523
      %v529 = vshll.u32 %v506, 16
      %v531 = vrot.slane %v529, 1
      %v532 = vsel %vm512, %v527, %v531
      %v533 = vshrl.u32 %v506, 16
      %v535 = vor.u32 %v533, %v531
      %v537 = vshll.u32 %v507, 16
      %v539 = vrot.slane %v537, 1
      %v540 = vsel %vm512, %v535, %v539
      %v541 = vshrl.u32 %v507, 16
      %v543 = vor.u32 %v541, %v539
      %v545 = vshll.u32 %v508, 16
      %v547 = vrot.slane %v545, 1
      %v548 = vsel %vm512, %v543, %v547
      %v549 = vshrl.u32 %v508, 16
      %v551 = vor.u32 %v549, %v547
      %v553 = vshll.u32 %v511, 16
      %v555 = vrot.slane %v553, 1
      %v556 = vsel %vm512, %v551, %v555
      %557 = vrot.lane.b32.xlu0 %v524, 32
      %v558 = vpop.permute.xlu0 %557
      %559 = vrot.lane.b32.xlu0 %v532, 32
      %v560 = vpop.permute.xlu0 %559
      %561 = vrot.lane.b32.xlu0 %v540, 32
      %v562 = vpop.permute.xlu0 %561
      %563 = vrot.lane.b32.xlu0 %v548, 32
      %v564 = vpop.permute.xlu0 %563
      %565 = vrot.lane.b32.xlu0 %v556, 32
      %v566 = vpop.permute.xlu0 %565
      %v568 = vunpack.c.l.b16 %v473
      %v569 = vpack.c.b16 %v495, %v568
      %vm570 = vcmask 1046528
      %v571 = vrot.slane %v569, 1
      %v572 = vrot.slane %v505, 1
      %v573 = vsel %vm570, %v571, %v572
      %v574 = vrot.slane %v506, 1
      %v575 = vsel %vm570, %v572, %v574
      %v576 = vrot.slane %v507, 1
      %v577 = vsel %vm570, %v574, %v576
      %v578 = vrot.slane %v508, 1
      %v579 = vsel %vm570, %v576, %v578
      %v580 = vrot.slane %v511, 1
      %v581 = vsel %vm570, %v578, %v580
      %582 = vrot.lane.b32.xlu0 %v573, 64
      %v583 = vpop.permute.xlu0 %582
      %584 = vrot.lane.b32.xlu0 %v575, 64
      %v585 = vpop.permute.xlu0 %584
      %586 = vrot.lane.b32.xlu0 %v577, 64
      %v587 = vpop.permute.xlu0 %586
      %588 = vrot.lane.b32.xlu0 %v579, 64
      %v589 = vpop.permute.xlu0 %588
      %590 = vrot.lane.b32.xlu0 %v581, 64
      %v591 = vpop.permute.xlu0 %590
      %v595 = vunpack.c.l.b16 %v474
      %v596 = vunpack.c.l.b16 %v475
      %v597 = vunpack.c.l.b16 %v476
      %v598 = vpack.c.b16 %v496, %v595
      %v599 = vpack.c.b16 %v498, %v497
      %v600 = vpack.c.b16 %v500, %v499
      %v601 = vpack.c.b16 %v502, %v501
      %v602 = vpack.c.b16 %v596, %v503
      %v603 = vpack.c.b16 %v597, %v597
      %v604 = vrot.slane %v598, 1
      %v605 = vrot.slane %v599, 1
      %v606 = vsel %vm570, %v604, %v605
      %v607 = vrot.slane %v600, 1
      %v608 = vsel %vm570, %v605, %v607
      %v609 = vrot.slane %v601, 1
      %v610 = vsel %vm570, %v607, %v609
      %v611 = vrot.slane %v602, 1
      %v612 = vsel %vm570, %v609, %v611
      %v613 = vrot.slane %v603, 1
      %v614 = vsel %vm570, %v611, %v613
      %615 = vrot.lane.b32.xlu0 %v606, 96
      %v616 = vpop.permute.xlu0 %615
      %617 = vrot.lane.b32.xlu0 %v608, 96
      %v618 = vpop.permute.xlu0 %617
      %619 = vrot.lane.b32.xlu0 %v610, 96
      %v620 = vpop.permute.xlu0 %619
      %621 = vrot.lane.b32.xlu0 %v612, 96
      %v622 = vpop.permute.xlu0 %621
      %623 = vrot.lane.b32.xlu0 %v614, 96
      %v624 = vpop.permute.xlu0 %623
      %v626 = vunpack.c.l.b16 %v477
      %v627 = vpack.c.b16 %v626, %v626
      %vm628 = vsmask.f32 6400
      %v630 = vshrl.u32 %v598, 16
      %v632 = vrot.slane %v630, 1
      %v633 = vshll.u32 %v598, 16
      %v635 = vrot.slane %v633, 2
      %v636 = vor.u32 %v632, %v635
      %v638 = vshrl.u32 %v599, 16
      %v640 = vrot.slane %v638, 1
      %v641 = vshll.u32 %v599, 16
      %v643 = vrot.slane %v641, 2
      %v644 = vor.u32 %v640, %v643
      %v645 = vsel %vm628, %v636, %v644
      %v647 = vshrl.u32 %v600, 16
      %v649 = vrot.slane %v647, 1
      %v650 = vshll.u32 %v600, 16
      %v652 = vrot.slane %v650, 2
      %v653 = vor.u32 %v649, %v652
      %v654 = vsel %vm628, %v644, %v653
      %v656 = vshrl.u32 %v601, 16
      %v658 = vrot.slane %v656, 1
      %v659 = vshll.u32 %v601, 16
      %v661 = vrot.slane %v659, 2
      %v662 = vor.u32 %v658, %v661
      %v663 = vsel %vm628, %v653, %v662
      %v665 = vshrl.u32 %v602, 16
      %v667 = vrot.slane %v665, 1
      %v668 = vshll.u32 %v602, 16
      %v670 = vrot.slane %v668, 2
      %v671 = vor.u32 %v667, %v670
      %v672 = vsel %vm628, %v662, %v671
      %v674 = vshrl.u32 %v627, 16
      %v676 = vrot.slane %v674, 1
      %v677 = vshll.u32 %v627, 16
      %v679 = vrot.slane %v677, 2
      %v680 = vor.u32 %v676, %v679
      %v681 = vsel %vm628, %v671, %v680
      %v683 = vunpack.c.l.b16 %v478
      %v684 = vpack.c.b16 %v496, %v683
      %vm685 = vcmask 1045504
      %v686 = vrot.slane %v684, 2
      %v687 = vrot.slane %v599, 2
      %v688 = vsel %vm685, %v686, %v687
      %v689 = vrot.slane %v600, 2
      %v690 = vsel %vm685, %v687, %v689
      %v691 = vrot.slane %v601, 2
      %v692 = vsel %vm685, %v689, %v691
      %v693 = vrot.slane %v602, 2
      %v694 = vsel %vm685, %v691, %v693
      %v695 = vrot.slane %v627, 2
      %v696 = vsel %vm685, %v693, %v695
      %697 = vrot.lane.b32.xlu0 %v688, 32
      %v698 = vpop.permute.xlu0 %697
      %699 = vrot.lane.b32.xlu0 %v690, 32
      %v700 = vpop.permute.xlu0 %699
      %701 = vrot.lane.b32.xlu0 %v692, 32
      %v702 = vpop.permute.xlu0 %701
      %703 = vrot.lane.b32.xlu0 %v694, 32
      %v704 = vpop.permute.xlu0 %703
      %705 = vrot.lane.b32.xlu0 %v696, 32
      %v706 = vpop.permute.xlu0 %705
      %v710 = vunpack.c.l.b16 %v479
      %v711 = vunpack.c.l.b16 %v480
      %v712 = vunpack.c.l.b16 %v481
      %v713 = vpack.c.b16 %v497, %v710
      %v714 = vpack.c.b16 %v711, %v596
      %v715 = vpack.c.b16 %v712, %v712
      %v716 = vrot.slane %v713, 2
      %v717 = vrot.slane %v506, 2
      %v718 = vsel %vm685, %v716, %v717
      %v719 = vrot.slane %v507, 2
      %v720 = vsel %vm685, %v717, %v719
      %v721 = vrot.slane %v508, 2
      %v722 = vsel %vm685, %v719, %v721
      %v723 = vrot.slane %v714, 2
      %v724 = vsel %vm685, %v721, %v723
      %v725 = vrot.slane %v715, 2
      %v726 = vsel %vm685, %v723, %v725
      %727 = vrot.lane.b32.xlu0 %v718, 64
      %v728 = vpop.permute.xlu0 %727
      %729 = vrot.lane.b32.xlu0 %v720, 64
      %v730 = vpop.permute.xlu0 %729
      %731 = vrot.lane.b32.xlu0 %v722, 64
      %v732 = vpop.permute.xlu0 %731
      %733 = vrot.lane.b32.xlu0 %v724, 64
      %v734 = vpop.permute.xlu0 %733
      %735 = vrot.lane.b32.xlu0 %v726, 64
      %v736 = vpop.permute.xlu0 %735
      %v738 = vunpack.c.l.b16 %v482
      %v739 = vpack.c.b16 %v738, %v738
      %vm740 = vsmask.f32 5376
      %v742 = vshrl.u32 %v713, 16
      %v744 = vrot.slane %v742, 2
      %v745 = vshll.u32 %v713, 16
      %v747 = vrot.slane %v745, 3
      %v748 = vor.u32 %v744, %v747
      %v749 = vrot.slane %v533, 2
      %v750 = vrot.slane %v529, 3
      %v751 = vor.u32 %v749, %v750
      %v752 = vsel %vm740, %v748, %v751
      %v753 = vrot.slane %v541, 2
      %v754 = vrot.slane %v537, 3
      %v755 = vor.u32 %v753, %v754
      %v756 = vsel %vm740, %v751, %v755
      %v757 = vrot.slane %v549, 2
      %v758 = vrot.slane %v545, 3
      %v759 = vor.u32 %v757, %v758
      %v760 = vsel %vm740, %v755, %v759
      %v762 = vshrl.u32 %v714, 16
      %v764 = vrot.slane %v762, 2
      %v765 = vshll.u32 %v714, 16
      %v767 = vrot.slane %v765, 3
      %v768 = vor.u32 %v764, %v767
      %v769 = vsel %vm740, %v759, %v768
      %v771 = vshrl.u32 %v739, 16
      %v773 = vrot.slane %v771, 2
      %v774 = vshll.u32 %v739, 16
      %v776 = vrot.slane %v774, 3
      %v777 = vor.u32 %v773, %v776
      %v778 = vsel %vm740, %v768, %v777
      %779 = vrot.lane.b32.xlu0 %v752, 96
      %v780 = vpop.permute.xlu0 %779
      %781 = vrot.lane.b32.xlu0 %v756, 96
      %v782 = vpop.permute.xlu0 %781
      %783 = vrot.lane.b32.xlu0 %v760, 96
      %v784 = vpop.permute.xlu0 %783
      %785 = vrot.lane.b32.xlu0 %v769, 96
      %v786 = vpop.permute.xlu0 %785
      %787 = vrot.lane.b32.xlu0 %v778, 96
      %v788 = vpop.permute.xlu0 %787
      %v790 = vunpack.c.l.b16 %v483
      %v791 = vpack.c.b16 %v497, %v790
      %vm792 = vcmask 1044480
      %v793 = vrot.slane %v791, 3
      %v794 = vrot.slane %v506, 3
      %v795 = vsel %vm792, %v793, %v794
      %v796 = vrot.slane %v507, 3
      %v797 = vsel %vm792, %v794, %v796
      %v798 = vrot.slane %v508, 3
      %v799 = vsel %vm792, %v796, %v798
      %v800 = vrot.slane %v714, 3
      %v801 = vsel %vm792, %v798, %v800
      %v802 = vrot.slane %v739, 3
      %v803 = vsel %vm792, %v800, %v802
      %vm804 = vcmask 261120
      %v806 = vsel %vm804, %v504, %v558
      %v808 = vsel %vm804, %v505, %v560
      %v810 = vsel %vm804, %v506, %v562
      %v812 = vsel %vm804, %v507, %v564
      %v814 = vsel %vm804, %v508, %v566
      %vm815 = vcmask 523264
      %v817 = vsel %vm815, %v806, %v583
      %v819 = vsel %vm815, %v808, %v585
      %v821 = vsel %vm815, %v810, %v587
      %v823 = vsel %vm815, %v812, %v589
      %v825 = vsel %vm815, %v814, %v591
      %vm826 = vcmask 785408
      %v828 = vsel %vm826, %v817, %v616
      %v831 = vsel %vm826, %v819, %v618
      %v834 = vsel %vm826, %v821, %v620
      %v837 = vsel %vm826, %v823, %v622
      %v840 = vsel %vm826, %v825, %v624
      %v844 = vsel %vm804, %v645, %v698
      %v847 = vsel %vm804, %v654, %v700
      %v850 = vsel %vm804, %v663, %v702
      %v853 = vsel %vm804, %v672, %v704
      %v856 = vsel %vm804, %v681, %v706
      %v858 = vsel %vm815, %v844, %v728
      %v860 = vsel %vm815, %v847, %v730
      %v862 = vsel %vm815, %v850, %v732
      %v864 = vsel %vm815, %v853, %v734
      %v866 = vsel %vm815, %v856, %v736
      %v868 = vsel %vm826, %v858, %v780
      %v871 = vsel %vm826, %v860, %v782
      %v874 = vsel %vm826, %v862, %v784
      %v877 = vsel %vm826, %v864, %v786
      %v880 = vsel %vm826, %v866, %v788
      %v882 = vld [vmem:[%s2] sm:$0xf]
      %v883 = vld [vmem:[%s2 + $0x4] sm:$0xf]
      %v884 = vld [vmem:[%s2 + $0x8] sm:$0xf]
      %v885 = vld [vmem:[%s2 + $0xc] sm:$0xf]
      %v886 = vld [vmem:[%s2 + $0x10] sm:$0xf]
      %v887 = vld [vmem:[%s2 + $0x14] sm:$0xf]
      %v888 = vld [vmem:[%s2 + $0x18] sm:$0xf]
      %v889 = vld [vmem:[%s2 + $0x1c] sm:$0xf]
      %v890 = vld [vmem:[%s2 + $0x20] sm:$0xf]
      %v891 = vld [vmem:[%s2 + $0x24] sm:$0xf]
      %v892 = vld [vmem:[%s2 + $0x28] sm:$0xf]
      %v893 = vld [vmem:[%s2 + $0x2c] sm:$0xf]
      %v894 = vld [vmem:[%s2 + $0x30] sm:$0xf]
      %v895 = vld [vmem:[%s2 + $0x34] sm:$0xf]
      %v896 = vld [vmem:[%s2 + $0x38] sm:$0xf]
      %v897 = vld [vmem:[%s2 + $0x3c] sm:$0xf]
      %v898 = vld [vmem:[%s2 + $0x40] sm:$0xf]
      %v899 = vld [vmem:[%s2 + $0x44] sm:$0xf]
      %v900 = vld [vmem:[%s2 + $0x48] sm:$0xf]
      %v901 = vld [vmem:[%s2 + $0x4c] sm:$0xf]
      %v902 = vld [vmem:[%s2 + $0x50] sm:$0xf]
      %v903 = vld [vmem:[%s2 + $0x54] sm:$0xf]
      %v904 = vld [vmem:[%s2 + $0x58] sm:$0xf]
      %v905 = vld [vmem:[%s2 + $0x5c] sm:$0xf]
      %v906 = vld [vmem:[%s2 + $0x60] sm:$0xf]
      %v907 = vld [vmem:[%s2 + $0x64] sm:$0xf]
      %v908 = vld [vmem:[%s2 + $0x68] sm:$0xf]
      %v909 = vld [vmem:[%s2 + $0x6c] sm:$0xf]
      %v910 = vld [vmem:[%s2 + $0x70] sm:$0xf]
      %v911 = vld [vmem:[%s2 + $0x74] sm:$0xf]
      %v912 = vld [vmem:[%s2 + $0x78] sm:$0xf]
      %v913 = vld [vmem:[%s2 + $0x7c] sm:$0xf]
      %v914 = vld [vmem:[%s2 + $0x80] sm:$0xf]
      %v915 = vld [vmem:[%s2 + $0x84] sm:$0xf]
      %v916 = vld [vmem:[%s2 + $0x88] sm:$0xf]
      %v917 = vld [vmem:[%s2 + $0x8c] sm:$0xf]
      %v954 = vunpack.c.l.b16 %v882
      %v955 = vunpack.c.l.b16 %v883
      %v956 = vunpack.c.l.b16 %v884
      %v957 = vunpack.c.l.b16 %v885
      %v958 = vunpack.c.l.b16 %v886
      %v959 = vunpack.c.l.b16 %v887
      %v960 = vunpack.c.l.b16 %v888
      %v961 = vunpack.c.l.b16 %v889
      %v962 = vunpack.c.l.b16 %v890
      %v963 = vunpack.c.l.b16 %v891
      %v964 = vunpack.c.l.b16 %v892
      %v965 = vunpack.c.l.b16 %v893
      %v966 = vunpack.c.l.b16 %v894
      %v967 = vunpack.c.l.b16 %v895
      %v968 = vunpack.c.l.b16 %v896
      %v969 = vunpack.c.l.b16 %v897
      %v970 = vunpack.c.l.b16 %v898
      %v971 = vunpack.c.l.b16 %v899
      %v972 = vunpack.c.l.b16 %v900
      %v973 = vunpack.c.l.b16 %v901
      %v974 = vunpack.c.l.b16 %v902
      %v975 = vunpack.c.l.b16 %v903
      %v976 = vunpack.c.l.b16 %v904
      %v977 = vunpack.c.l.b16 %v905
      %v978 = vunpack.c.l.b16 %v906
      %v979 = vunpack.c.l.b16 %v907
      %v980 = vunpack.c.l.b16 %v908
      %v981 = vunpack.c.l.b16 %v909
      %v982 = vunpack.c.l.b16 %v910
      %v983 = vunpack.c.l.b16 %v911
      %v984 = vunpack.c.l.b16 %v912
      %v985 = vunpack.c.l.b16 %v913
      %v986 = vunpack.c.l.b16 %v914
      %v987 = vunpack.c.l.b16 %v915
      %v988 = vunpack.c.l.b16 %v916
      %v989 = vunpack.c.l.b16 %v917
      %v990 = vpack.c.b16 %v955, %v954
      %v991 = vpack.c.b16 %v957, %v956
      %v992 = vpack.c.b16 %v959, %v958
      %v993 = vpack.c.b16 %v961, %v960
      %v994 = vpack.c.b16 %v963, %v962
      %v995 = vpack.c.b16 %v965, %v964
      %v996 = vpack.c.b16 %v967, %v966
      %v997 = vpack.c.b16 %v969, %v968
      %v998 = vpack.c.b16 %v971, %v970
      %v999 = vpack.c.b16 %v973, %v972
      %v1000 = vpack.c.b16 %v975, %v974
      %v1001 = vpack.c.b16 %v977, %v976
      %v1002 = vpack.c.b16 %v979, %v978
      %v1003 = vpack.c.b16 %v981, %v980
      %v1004 = vpack.c.b16 %v983, %v982
      %v1005 = vpack.c.b16 %v985, %v984
      %v1006 = vpack.c.b16 %v987, %v986
      %v1007 = vpack.c.b16 %v989, %v988
      %v1027 = vsel %vm804, %v795, 0
      %v1030 = vsel %vm804, %v797, 0
      %v1033 = vsel %vm804, %v799, 0
      %v1036 = vsel %vm804, %v801, 0
      %v1039 = vsel %vm804, %v803, 0
      %1041 = vmatprep.subr.bf16.mxu0 0
      %1042 = vmatpush1.bf16.msra.mxu0 %v990
      %1043 = vmatprep.subr.bf16.mxu0 0
      %1044 = vmatpush1.bf16.msra.mxu0 %v991
      %1045 = vmatprep.subr.bf16.mxu0 0
      %1046 = vmatpush1.bf16.msra.mxu0 %v992
      %1047 = vmatprep.subr.bf16.mxu0 0
      %1048 = vmatpush1.bf16.msra.mxu0 %v993
      %1049 = vmatprep.subr.bf16.mxu0 0
      %1050 = vmatpush1.bf16.msra.mxu0 %v994
      %1051 = vmatprep.subr.bf16.mxu0 0
      %1052 = vmatpush1.bf16.msra.mxu0 %v995
      %1053 = vmatprep.subr.bf16.mxu0 0
      %1054 = vmatpush1.bf16.msra.mxu0 %v996
      %1055 = vmatprep.subr.bf16.mxu0 0
      %1056 = vmatpush1.bf16.msra.mxu0 %v997
      %1057 = vmatprep.subr.bf16.mxu0 0
      %1058 = vmatpush1.bf16.msra.mxu0 %v998
      %1059 = vmatprep.subr.bf16.mxu0 0
      %1060 = vmatpush1.bf16.msra.mxu0 %v999
      %1061 = vmatprep.subr.bf16.mxu0 0
      %1062 = vmatpush1.bf16.msra.mxu0 %v1000
      %1063 = vmatprep.subr.bf16.mxu0 0
      %1064 = vmatpush1.bf16.msra.mxu0 %v1001
      %1065 = vmatprep.subr.bf16.mxu0 0
      %1066 = vmatpush1.bf16.msra.mxu0 %v1002
      %1067 = vmatprep.subr.bf16.mxu0 0
      %1068 = vmatpush1.bf16.msra.mxu0 %v1003
      %1069 = vmatprep.subr.bf16.mxu0 0
      %1070 = vmatpush1.bf16.msra.mxu0 %v1004
      %1071 = vmatprep.subr.bf16.mxu0 0
      %1072 = vmatpush1.bf16.msra.mxu0 %v1005
      %1073 = vmatprep.mubr.bf16.mxu0 %v868
      %1074 = vmatmul.mubr.bf16.gmra.mrb[0].mxu0 %v828
      %v1075 = vpop.f32.mrb[0].mxu0
      %v1076 = vadd.f32 0.0, %v1075
      %v1077 = vpop.f32.mrb[0].mxu0
      %v1078 = vpop.f32.mrb[0].mxu0
      %v1079 = vadd.f32 0.0, %v1078
      %v1080 = vpop.f32.mrb[0].mxu0
      %1081 = vmatprep.mubr.bf16.mxu0 %v871
      %1082 = vmatmul.mubr.bf16.gmra.mrb[0].mxu0 %v831
      %v1083 = vpop.f32.mrb[0].mxu0
      %v1084 = vadd.f32 0.0, %v1083
      %v1085 = vpop.f32.mrb[0].mxu0
      %v1086 = vpop.f32.mrb[0].mxu0
      %v1087 = vadd.f32 0.0, %v1086
      %v1088 = vpop.f32.mrb[0].mxu0
      %1089 = vmatprep.mubr.bf16.mxu0 %v874
      %1090 = vmatmul.mubr.bf16.gmra.mrb[0].mxu0 %v834
      %v1091 = vpop.f32.mrb[0].mxu0
      %v1092 = vadd.f32 0.0, %v1091
      %v1093 = vpop.f32.mrb[0].mxu0
      %v1094 = vpop.f32.mrb[0].mxu0
      %v1095 = vadd.f32 0.0, %v1094
      %v1096 = vpop.f32.mrb[0].mxu0
      %1097 = vmatprep.mubr.bf16.mxu0 %v877
      %1098 = vmatmul.mubr.bf16.gmra.mrb[0].mxu0 %v837
      %v1099 = vpop.f32.mrb[0].mxu0
      %v1100 = vadd.f32 0.0, %v1099
      %v1101 = vpop.f32.mrb[0].mxu0
      %v1102 = vpop.f32.mrb[0].mxu0
      %v1103 = vadd.f32 0.0, %v1102
      %v1104 = vpop.f32.mrb[0].mxu0
      %1105 = vmatprep.mubr.bf16.mxu0 %v880
      %1106 = vmatmul.mubr.bf16.gmra.mrb[0].mxu0 %v840
      %v1107 = vpop.f32.mrb[0].mxu0
      %v1108 = vadd.f32 0.0, %v1107
      %v1109 = vpop.f32.mrb[0].mxu0
      %v1110 = vpop.f32.mrb[0].mxu0
      %v1111 = vadd.f32 0.0, %v1110
      %v1112 = vpop.f32.mrb[0].mxu0
      %1113 = vdwg.mxu0
      %1114 = vmatprep.subr.bf16.mxu0 0
      %1115 = vmatpush1.bf16.msra.mxu0 %v1006
      %1116 = vmatprep.subr.bf16.mxu0 0
      %1117 = vmatpush1.bf16.msra.mxu0 %v1007
      %1118 = vmatprep.subr.bf16.mxu0 0
      %1119 = vmatpush1.bf16.msra.mxu0 0
      %1120 = vmatprep.subr.bf16.mxu0 0
      %1121 = vmatpush1.bf16.msra.mxu0 0
      %1122 = vmatprep.subr.bf16.mxu0 0
      %1123 = vmatpush1.bf16.msra.mxu0 0
      %1124 = vmatprep.subr.bf16.mxu0 0
      %1125 = vmatpush1.bf16.msra.mxu0 0
      %1126 = vmatprep.subr.bf16.mxu0 0
      %1127 = vmatpush1.bf16.msra.mxu0 0
      %1128 = vmatprep.subr.bf16.mxu0 0
      %1129 = vmatpush1.bf16.msra.mxu0 0
      %1130 = vmatprep.subr.bf16.mxu0 0
      %1131 = vmatpush1.bf16.msra.mxu0 0
      %1132 = vmatprep.subr.bf16.mxu0 0
      %1133 = vmatpush1.bf16.msra.mxu0 0
      %1134 = vmatprep.subr.bf16.mxu0 0
      %1135 = vmatpush1.bf16.msra.mxu0 0
      %1136 = vmatprep.subr.bf16.mxu0 0
      %1137 = vmatpush1.bf16.msra.mxu0 0
      %1138 = vmatprep.subr.bf16.mxu0 0
      %1139 = vmatpush1.bf16.msra.mxu0 0
      %1140 = vmatprep.subr.bf16.mxu0 0
      %1141 = vmatpush1.bf16.msra.mxu0 0
      %1142 = vmatprep.subr.bf16.mxu0 0
      %1143 = vmatpush1.bf16.msra.mxu0 0
      %1144 = vmatprep.subr.bf16.mxu0 0
      %1145 = vmatpush1.bf16.msra.mxu0 0
      %1146 = vmatprep.mubr.bf16.mxu0 0
      %1147 = vmatmul.mubr.bf16.gmra.mrb[0].mxu0 %v1027
      %v1148 = vpop.f32.mrb[0].mxu0
      %v1149 = vadd.f32 %v1076, %v1148
      %v1150 = vpop.f32.mrb[0].mxu0
      %v1151 = vpop.f32.mrb[0].mxu0
      %v1152 = vadd.f32 %v1079, %v1151
      %v1153 = vpop.f32.mrb[0].mxu0
      %1154 = vmatprep.mubr.bf16.mxu0 0
      %1155 = vmatmul.mubr.bf16.gmra.mrb[0].mxu0 %v1030
      %v1156 = vpop.f32.mrb[0].mxu0
      %v1157 = vadd.f32 %v1084, %v1156
      %v1158 = vpop.f32.mrb[0].mxu0
      %v1159 = vpop.f32.mrb[0].mxu0
      %v1160 = vadd.f32 %v1087, %v1159
      %v1161 = vpop.f32.mrb[0].mxu0
      %1162 = vmatprep.mubr.bf16.mxu0 0
      %1163 = vmatmul.mubr.bf16.gmra.mrb[0].mxu0 %v1033
      %v1164 = vpop.f32.mrb[0].mxu0
      %v1165 = vadd.f32 %v1092, %v1164
      %v1166 = vpop.f32.mrb[0].mxu0
      %v1167 = vpop.f32.mrb[0].mxu0
      %v1168 = vadd.f32 %v1095, %v1167
      %v1169 = vpop.f32.mrb[0].mxu0
      %1170 = vmatprep.mubr.bf16.mxu0 0
      %1171 = vmatmul.mubr.bf16.gmra.mrb[0].mxu0 %v1036
      %v1172 = vpop.f32.mrb[0].mxu0
      %v1173 = vadd.f32 %v1100, %v1172
      %v1174 = vpop.f32.mrb[0].mxu0
      %v1175 = vpop.f32.mrb[0].mxu0
      %v1176 = vadd.f32 %v1103, %v1175
      %v1177 = vpop.f32.mrb[0].mxu0
      %1178 = vmatprep.mubr.bf16.mxu0 0
      %1179 = vmatmul.mubr.bf16.gmra.mrb[0].mxu0 %v1039
      %v1180 = vpop.f32.mrb[0].mxu0
      %v1181 = vadd.f32 %v1108, %v1180
      %v1182 = vpop.f32.mrb[0].mxu0
      %v1183 = vpop.f32.mrb[0].mxu0
      %v1184 = vadd.f32 %v1111, %v1183
      %v1185 = vpop.f32.mrb[0].mxu0
      %1186 = vdwg.mxu0
      %v1187 = vld [vmem:[%s3] sm:$0x1]
      %v1189 = vlaneseq
      %v1190 = vshrl.u32 %v1189, 7
      %v1191 = vsub.s32 0, %v1190
      %v1192 = vrot.slane %v1187, %v1191
      %v1194 = vmul.f32 %v1149, %v1192
      %v1195 = vmul.f32 %v1152, %v1192
      %v1196 = vmul.f32 %v1157, %v1192
      %v1197 = vmul.f32 %v1160, %v1192
      %v1198 = vmul.f32 %v1165, %v1192
      %v1199 = vmul.f32 %v1168, %v1192
      %v1200 = vmul.f32 %v1173, %v1192
      %v1201 = vmul.f32 %v1176, %v1192
      %v1202 = vmul.f32 %v1181, %v1192
      %v1203 = vmul.f32 %v1184, %v1192
      %v1204 = vld [vmem:[%s4] sm:$0x1]
      %v1206 = vlaneseq
      %v1207 = vshrl.u32 %v1206, 7
      %v1208 = vsub.s32 0, %v1207
      %v1209 = vrot.slane %v1204, %v1208
      %v1211 = vadd.f32 %v1194, %v1209
      %v1212 = vadd.f32 %v1195, %v1209
      %v1213 = vadd.f32 %v1196, %v1209
      %v1214 = vadd.f32 %v1197, %v1209
      %v1215 = vadd.f32 %v1198, %v1209
      %v1216 = vadd.f32 %v1199, %v1209
      %v1217 = vadd.f32 %v1200, %v1209
      %v1218 = vadd.f32 %v1201, %v1209
      %v1219 = vadd.f32 %v1202, %v1209
      %v1220 = vadd.f32 %v1203, %v1209
      %v1221 = vld [vmem:[%s5] sm:$0xff]
      %v1222 = vld [vmem:[%s5 + $0x8] sm:$0xff]
      %v1223 = vld [vmem:[%s5 + $0x10] sm:$0xff]
      %v1224 = vld [vmem:[%s5 + $0x18] sm:$0xff]
      %v1225 = vld [vmem:[%s5 + $0x20] sm:$0xff]
      %v1226 = vld [vmem:[%s5 + $0x28] sm:$0xff]
      %v1227 = vld [vmem:[%s5 + $0x30] sm:$0xff]
      %v1228 = vld [vmem:[%s5 + $0x38] sm:$0xff]
      %v1229 = vld [vmem:[%s5 + $0x40] sm:$0xff]
      %v1230 = vld [vmem:[%s5 + $0x48] sm:$0xff]
      %1232 = vset.pattern.permute.xlu0 0
      %1233 = vperm.xlu0 %1232, %v1221
      %v1234 = vpop.permute.xlu0 %1233
      %1237 = vset.pattern.permute.xlu0 0
      %1238 = vperm.xlu0 %1237, %v1222
      %v1239 = vpop.permute.xlu0 %1238
      %1242 = vset.pattern.permute.xlu0 0
      %1243 = vperm.xlu0 %1242, %v1223
      %v1244 = vpop.permute.xlu0 %1243
      %1247 = vset.pattern.permute.xlu0 0
      %1248 = vperm.xlu0 %1247, %v1224
      %v1249 = vpop.permute.xlu0 %1248
      %1252 = vset.pattern.permute.xlu0 0
      %1253 = vperm.xlu0 %1252, %v1225
      %v1254 = vpop.permute.xlu0 %1253
      %1257 = vset.pattern.permute.xlu0 0
      %1258 = vperm.xlu0 %1257, %v1226
      %v1259 = vpop.permute.xlu0 %1258
      %1262 = vset.pattern.permute.xlu0 0
      %1263 = vperm.xlu0 %1262, %v1227
      %v1264 = vpop.permute.xlu0 %1263
      %1267 = vset.pattern.permute.xlu0 0
      %1268 = vperm.xlu0 %1267, %v1228
      %v1269 = vpop.permute.xlu0 %1268
      %1272 = vset.pattern.permute.xlu0 0
      %1273 = vperm.xlu0 %1272, %v1229
      %v1274 = vpop.permute.xlu0 %1273
      %1277 = vset.pattern.permute.xlu0 0
      %1278 = vperm.xlu0 %1277, %v1230
      %v1279 = vpop.permute.xlu0 %1278
      %v1281 = vmul.f32 %v1211, %v1234
      %v1282 = vmul.f32 %v1212, %v1239
      %v1283 = vmul.f32 %v1213, %v1244
      %v1284 = vmul.f32 %v1214, %v1249
      %v1285 = vmul.f32 %v1215, %v1254
      %v1286 = vmul.f32 %v1216, %v1259
      %v1287 = vmul.f32 %v1217, %v1264
      %v1288 = vmul.f32 %v1218, %v1269
      %v1289 = vmul.f32 %v1219, %v1274
      %v1290 = vmul.f32 %v1220, %v1279
      %v1291 = vsel %vm804, %v1281, 0.0
      %v1292 = vsel %vm804, %v1282, 0.0
      %v1293 = vadd.f32 %v1291, %v1292
      %v1294 = vsel %vm804, %v1283, 0.0
      %v1295 = vadd.f32 %v1293, %v1294
      %v1296 = vsel %vm804, %v1284, 0.0
      %v1297 = vadd.f32 %v1295, %v1296
      %v1298 = vsel %vm804, %v1285, 0.0
      %v1299 = vadd.f32 %v1297, %v1298
      %v1300 = vsel %vm804, %v1286, 0.0
      %v1301 = vadd.f32 %v1299, %v1300
      %v1302 = vsel %vm804, %v1287, 0.0
      %v1303 = vadd.f32 %v1301, %v1302
      %v1304 = vsel %vm804, %v1288, 0.0
      %v1305 = vadd.f32 %v1303, %v1304
      %v1306 = vsel %vm804, %v1289, 0.0
      %v1307 = vadd.f32 %v1305, %v1306
      %v1308 = vsel %vm804, %v1290, 0.0
      %v1309 = vadd.f32 %v1307, %v1308
      %v1310 = vrot.slane %v1309, 4
      %v1311 = vadd.f32 %v1309, %v1310
      %v1312 = vrot.slane %v1311, 2
      %v1313 = vadd.f32 %v1311, %v1312
      %v1314 = vrot.slane %v1313, 1
      %v1315 = vadd.f32 %v1313, %v1314
      %v1316 = vmul.f32 %v1315, 0.015625
      %v1317 = vld [vmem:[%s9] sm:$0xff]
      %v1318 = vld [vmem:[%s9 + $0x8] sm:$0xff]
      %v1319 = vld [vmem:[%s9 + $0x10] sm:$0xff]
      %v1320 = vld [vmem:[%s9 + $0x18] sm:$0xff]
      %v1321 = vld [vmem:[%s10] sm:$0x1]
      %v1323 = vsel %vm804, %v1316, 0
      %1325 = vmatprep.subr.mxu0 0.0
      %1326 = vmatpush1.msra.mxu0 %v1317
      %1327 = vmatprep.subr.mxu0 0.0
      %1328 = vmatpush1.msra.mxu0 %v1318
      %1329 = vmatprep.subr.mxu0 0.0
      %1330 = vmatpush1.msra.mxu0 %v1319
      %1331 = vmatprep.subr.mxu0 0.0
      %1332 = vmatpush1.msra.mxu0 %v1320
      %1333 = vmatprep.subr.mxu0 0.0
      %1334 = vmatpush1.msra.mxu0 0.0
      %1335 = vmatprep.subr.mxu0 0.0
      %1336 = vmatpush1.msra.mxu0 0.0
      %1337 = vmatprep.subr.mxu0 0.0
      %1338 = vmatpush1.msra.mxu0 0.0
      %1339 = vmatprep.subr.mxu0 0.0
      %1340 = vmatpush1.msra.mxu0 0.0
      %1341 = vmatprep.subr.mxu0 0.0
      %1342 = vmatpush1.msra.mxu0 0.0
      %1343 = vmatprep.subr.mxu0 0.0
      %1344 = vmatpush1.msra.mxu0 0.0
      %1345 = vmatprep.subr.mxu0 0.0
      %1346 = vmatpush1.msra.mxu0 0.0
      %1347 = vmatprep.subr.mxu0 0.0
      %1348 = vmatpush1.msra.mxu0 0.0
      %1349 = vmatprep.subr.mxu0 0.0
      %1350 = vmatpush1.msra.mxu0 0.0
      %1351 = vmatprep.subr.mxu0 0.0
      %1352 = vmatpush1.msra.mxu0 0.0
      %1353 = vmatprep.subr.mxu0 0.0
      %1354 = vmatpush1.msra.mxu0 0.0
      %1355 = vmatprep.subr.mxu0 0.0
      %1356 = vmatpush1.msra.mxu0 0.0
      %1357 = vmatprep.subr.mxu0 0.0
      %1358 = vmatpush1.msra.mxu0 0.0
      %1359 = vmatprep.subr.mxu0 0.0
      %1360 = vmatpush1.msra.mxu0 0.0
      %1361 = vmatprep.subr.mxu0 0.0
      %1362 = vmatpush1.msra.mxu0 0.0
      %1363 = vmatprep.subr.mxu0 0.0
      %1364 = vmatpush1.msra.mxu0 0.0
      %1365 = vmatprep.subr.mxu0 0.0
      %1366 = vmatpush1.msra.mxu0 0.0
      %1367 = vmatprep.subr.mxu0 0.0
      %1368 = vmatpush1.msra.mxu0 0.0
      %1369 = vmatprep.subr.mxu0 0.0
      %1370 = vmatpush1.msra.mxu0 0.0
      %1371 = vmatprep.subr.mxu0 0.0
      %1372 = vmatpush1.msra.mxu0 0.0
      %1373 = vmatprep.subr.mxu0 0.0
      %1374 = vmatpush1.msra.mxu0 0.0
      %1375 = vmatprep.subr.mxu0 0.0
      %1376 = vmatpush1.msra.mxu0 0.0
      %1377 = vmatprep.subr.mxu0 0.0
      %1378 = vmatpush1.msra.mxu0 0.0
      %1379 = vmatprep.subr.mxu0 0.0
      %1380 = vmatpush1.msra.mxu0 0.0
      %1381 = vmatprep.subr.mxu0 0.0
      %1382 = vmatpush1.msra.mxu0 0.0
      %1383 = vmatprep.subr.mxu0 0.0
      %1384 = vmatpush1.msra.mxu0 0.0
      %1385 = vmatprep.subr.mxu0 0.0
      %1386 = vmatpush1.msra.mxu0 0.0
      %1387 = vmatprep.subr.mxu0 0.0
      %1388 = vmatpush1.msra.mxu0 0.0
      %1389 = vmatprep.mubr.f32.mxu0 0.0
      %1390 = vmatmul.mubr.f32.gmra.mrb[0].mxu0 %v1323
      %v1391 = vpop.f32.mrb[0].mxu0
      %v1392 = vadd.f32 %v1321, %v1391
      %v1393 = vpop.f32.mrb[0].mxu0
      %1394 = vdwg.mxu0
      %v1395 = vmax.f32 %v1392, 0.0
      %v1396 = vld [vmem:[%s11] sm:$0xff]
      %v1397 = vld [vmem:[%s12] sm:$0x1]
      %vm1398 = vcmask 64512
      %v1400 = vsel %vm1398, %v1395, 0
      %1402 = vmatprep.subr.mxu0 0.0
      %1403 = vmatpush1.msra.mxu0 %v1396
      %1404 = vmatprep.subr.mxu0 0.0
      %1405 = vmatpush1.msra.mxu0 0.0
      %1406 = vmatprep.subr.mxu0 0.0
      %1407 = vmatpush1.msra.mxu0 0.0
      %1408 = vmatprep.subr.mxu0 0.0
      %1409 = vmatpush1.msra.mxu0 0.0
      %1410 = vmatprep.subr.mxu0 0.0
      %1411 = vmatpush1.msra.mxu0 0.0
      %1412 = vmatprep.subr.mxu0 0.0
      %1413 = vmatpush1.msra.mxu0 0.0
      %1414 = vmatprep.subr.mxu0 0.0
      %1415 = vmatpush1.msra.mxu0 0.0
      %1416 = vmatprep.subr.mxu0 0.0
      %1417 = vmatpush1.msra.mxu0 0.0
      %1418 = vmatprep.subr.mxu0 0.0
      %1419 = vmatpush1.msra.mxu0 0.0
      %1420 = vmatprep.subr.mxu0 0.0
      %1421 = vmatpush1.msra.mxu0 0.0
      %1422 = vmatprep.subr.mxu0 0.0
      %1423 = vmatpush1.msra.mxu0 0.0
      %1424 = vmatprep.subr.mxu0 0.0
      %1425 = vmatpush1.msra.mxu0 0.0
      %1426 = vmatprep.subr.mxu0 0.0
      %1427 = vmatpush1.msra.mxu0 0.0
      %1428 = vmatprep.subr.mxu0 0.0
      %1429 = vmatpush1.msra.mxu0 0.0
      %1430 = vmatprep.subr.mxu0 0.0
      %1431 = vmatpush1.msra.mxu0 0.0
      %1432 = vmatprep.subr.mxu0 0.0
      %1433 = vmatpush1.msra.mxu0 0.0
      %1434 = vmatprep.subr.mxu0 0.0
      %1435 = vmatpush1.msra.mxu0 0.0
      %1436 = vmatprep.subr.mxu0 0.0
      %1437 = vmatpush1.msra.mxu0 0.0
      %1438 = vmatprep.subr.mxu0 0.0
      %1439 = vmatpush1.msra.mxu0 0.0
      %1440 = vmatprep.subr.mxu0 0.0
      %1441 = vmatpush1.msra.mxu0 0.0
      %1442 = vmatprep.subr.mxu0 0.0
      %1443 = vmatpush1.msra.mxu0 0.0
      %1444 = vmatprep.subr.mxu0 0.0
      %1445 = vmatpush1.msra.mxu0 0.0
      %1446 = vmatprep.subr.mxu0 0.0
      %1447 = vmatpush1.msra.mxu0 0.0
      %1448 = vmatprep.subr.mxu0 0.0
      %1449 = vmatpush1.msra.mxu0 0.0
      %1450 = vmatprep.subr.mxu0 0.0
      %1451 = vmatpush1.msra.mxu0 0.0
      %1452 = vmatprep.subr.mxu0 0.0
      %1453 = vmatpush1.msra.mxu0 0.0
      %1454 = vmatprep.subr.mxu0 0.0
      %1455 = vmatpush1.msra.mxu0 0.0
      %1456 = vmatprep.subr.mxu0 0.0
      %1457 = vmatpush1.msra.mxu0 0.0
      %1458 = vmatprep.subr.mxu0 0.0
      %1459 = vmatpush1.msra.mxu0 0.0
      %1460 = vmatprep.subr.mxu0 0.0
      %1461 = vmatpush1.msra.mxu0 0.0
      %1462 = vmatprep.subr.mxu0 0.0
      %1463 = vmatpush1.msra.mxu0 0.0
      %1464 = vmatprep.subr.mxu0 0.0
      %1465 = vmatpush1.msra.mxu0 0.0
      %1466 = vmatprep.mubr.f32.mxu0 0.0
      %1467 = vmatmul.mubr.f32.gmra.mrb[0].mxu0 %v1400
      %v1468 = vpop.f32.mrb[0].mxu0
      %v1469 = vadd.f32 %v1397, %v1468
      %v1470 = vpop.f32.mrb[0].mxu0
      %1471 = vdwg.mxu0
      %v1472 = vsub.f32 0.0, %v1469
      %v1473 = vmul.f32 %v1472, 1.442695
      %v1474 = vpow.pop %v1473
      %v1475 = vadd.f32 %v1474, 1.0
      %v1476 = vrcp.pop %v1475
      %v1477 = vmul.f32 1.0, %v1476
      %v1478 = vld [vmem:[%s455] sm:$0xf]
      %v1479 = vld [vmem:[%s455 + $0x4] sm:$0xf]
      %v1480 = vld [vmem:[%s455 + $0x8] sm:$0xf]
      %v1481 = vld [vmem:[%s455 + $0xc] sm:$0xf]
      %v1482 = vld [vmem:[%s455 + $0x10] sm:$0xf]
      %v1483 = vld [vmem:[%s455 + $0x14] sm:$0xf]
      %v1484 = vld [vmem:[%s455 + $0x18] sm:$0xf]
      %v1485 = vld [vmem:[%s455 + $0x1c] sm:$0xf]
      %v1486 = vld [vmem:[%s455 + $0x20] sm:$0xf]
      %v1487 = vld [vmem:[%s455 + $0x24] sm:$0xf]
      %v1488 = vld [vmem:[%s6] sm:$0xf]
      %v1489 = vld [vmem:[%s6 + $0x4] sm:$0xf]
      %v1500 = vunpack.c.l.b16 %v1478
      %v1501 = vunpack.c.l.b16 %v1479
      %v1502 = vunpack.c.l.b16 %v1480
      %v1503 = vunpack.c.l.b16 %v1481
      %v1504 = vunpack.c.l.b16 %v1482
      %v1505 = vunpack.c.l.b16 %v1483
      %v1506 = vunpack.c.l.b16 %v1484
      %v1507 = vunpack.c.l.b16 %v1485
      %v1508 = vunpack.c.l.b16 %v1486
      %v1509 = vunpack.c.l.b16 %v1487
      %v1510 = vpack.c.b16 %v1501, %v1500
      %v1511 = vpack.c.b16 %v1503, %v1502
      %v1512 = vpack.c.b16 %v1505, %v1504
      %v1513 = vpack.c.b16 %v1507, %v1506
      %v1514 = vpack.c.b16 %v1509, %v1508
      %v1517 = vunpack.c.l.b16 %v1488
      %v1518 = vunpack.c.l.b16 %v1489
      %v1519 = vpack.c.b16 %v1518, %v1517
      %vm1521 = vcmask 130048
      %v1523 = vsel %vm1521, %v1510, 0
      %v1526 = vsel %vm1521, %v1511, 0
      %v1529 = vsel %vm1521, %v1512, 0
      %v1532 = vsel %vm1521, %v1513, 0
      %v1535 = vsel %vm1521, %v1514, 0
      %1537 = vmatprep.subr.bf16.mxu0 0
      %1538 = vmatpush1.bf16.msra.mxu0 %v1519
      %1539 = vmatprep.subr.bf16.mxu0 0
      %1540 = vmatpush1.bf16.msra.mxu0 0
      %1541 = vmatprep.subr.bf16.mxu0 0
      %1542 = vmatpush1.bf16.msra.mxu0 0
      %1543 = vmatprep.subr.bf16.mxu0 0
      %1544 = vmatpush1.bf16.msra.mxu0 0
      %1545 = vmatprep.subr.bf16.mxu0 0
      %1546 = vmatpush1.bf16.msra.mxu0 0
      %1547 = vmatprep.subr.bf16.mxu0 0
      %1548 = vmatpush1.bf16.msra.mxu0 0
      %1549 = vmatprep.subr.bf16.mxu0 0
      %1550 = vmatpush1.bf16.msra.mxu0 0
      %1551 = vmatprep.subr.bf16.mxu0 0
      %1552 = vmatpush1.bf16.msra.mxu0 0
      %1553 = vmatprep.subr.bf16.mxu0 0
      %1554 = vmatpush1.bf16.msra.mxu0 0
      %1555 = vmatprep.subr.bf16.mxu0 0
      %1556 = vmatpush1.bf16.msra.mxu0 0
      %1557 = vmatprep.subr.bf16.mxu0 0
      %1558 = vmatpush1.bf16.msra.mxu0 0
      %1559 = vmatprep.subr.bf16.mxu0 0
      %1560 = vmatpush1.bf16.msra.mxu0 0
      %1561 = vmatprep.subr.bf16.mxu0 0
      %1562 = vmatpush1.bf16.msra.mxu0 0
      %1563 = vmatprep.subr.bf16.mxu0 0
      %1564 = vmatpush1.bf16.msra.mxu0 0
      %1565 = vmatprep.subr.bf16.mxu0 0
      %1566 = vmatpush1.bf16.msra.mxu0 0
      %1567 = vmatprep.subr.bf16.mxu0 0
      %1568 = vmatpush1.bf16.msra.mxu0 0
      %1569 = vmatprep.mubr.bf16.mxu0 0
      %1570 = vmatmul.mubr.bf16.gmra.mrb[0].mxu0 %v1523
      %v1571 = vpop.f32.mrb[0].mxu0
      %v1572 = vadd.f32 0.0, %v1571
      %v1573 = vpop.f32.mrb[0].mxu0
      %v1574 = vpop.f32.mrb[0].mxu0
      %v1575 = vadd.f32 0.0, %v1574
      %v1576 = vpop.f32.mrb[0].mxu0
      %1577 = vmatprep.mubr.bf16.mxu0 0
      %1578 = vmatmul.mubr.bf16.gmra.mrb[0].mxu0 %v1526
      %v1579 = vpop.f32.mrb[0].mxu0
      %v1580 = vadd.f32 0.0, %v1579
      %v1581 = vpop.f32.mrb[0].mxu0
      %v1582 = vpop.f32.mrb[0].mxu0
      %v1583 = vadd.f32 0.0, %v1582
      %v1584 = vpop.f32.mrb[0].mxu0
      %1585 = vmatprep.mubr.bf16.mxu0 0
      %1586 = vmatmul.mubr.bf16.gmra.mrb[0].mxu0 %v1529
      %v1587 = vpop.f32.mrb[0].mxu0
      %v1588 = vadd.f32 0.0, %v1587
      %v1589 = vpop.f32.mrb[0].mxu0
      %v1590 = vpop.f32.mrb[0].mxu0
      %v1591 = vadd.f32 0.0, %v1590
      %v1592 = vpop.f32.mrb[0].mxu0
      %1593 = vmatprep.mubr.bf16.mxu0 0
      %1594 = vmatmul.mubr.bf16.gmra.mrb[0].mxu0 %v1532
      %v1595 = vpop.f32.mrb[0].mxu0
      %v1596 = vadd.f32 0.0, %v1595
      %v1597 = vpop.f32.mrb[0].mxu0
      %v1598 = vpop.f32.mrb[0].mxu0
      %v1599 = vadd.f32 0.0, %v1598
      %v1600 = vpop.f32.mrb[0].mxu0
      %1601 = vmatprep.mubr.bf16.mxu0 0
      %1602 = vmatmul.mubr.bf16.gmra.mrb[0].mxu0 %v1535
      %v1603 = vpop.f32.mrb[0].mxu0
      %v1604 = vadd.f32 0.0, %v1603
      %v1605 = vpop.f32.mrb[0].mxu0
      %v1606 = vpop.f32.mrb[0].mxu0
      %v1607 = vadd.f32 0.0, %v1606
      %v1608 = vpop.f32.mrb[0].mxu0
      %1609 = vdwg.mxu0
      %v1610 = vld [vmem:[%s7] sm:$0x1]
      %v1612 = vlaneseq
      %v1613 = vshrl.u32 %v1612, 7
      %v1614 = vsub.s32 0, %v1613
      %v1615 = vrot.slane %v1610, %v1614
      %v1617 = vmul.f32 %v1572, %v1615
      %v1618 = vmul.f32 %v1575, %v1615
      %v1619 = vmul.f32 %v1580, %v1615
      %v1620 = vmul.f32 %v1583, %v1615
      %v1621 = vmul.f32 %v1588, %v1615
      %v1622 = vmul.f32 %v1591, %v1615
      %v1623 = vmul.f32 %v1596, %v1615
      %v1624 = vmul.f32 %v1599, %v1615
      %v1625 = vmul.f32 %v1604, %v1615
      %v1626 = vmul.f32 %v1607, %v1615
      %v1627 = vld [vmem:[%s8] sm:$0x1]
      %v1629 = vlaneseq
      %v1630 = vshrl.u32 %v1629, 7
      %v1631 = vsub.s32 0, %v1630
      %v1632 = vrot.slane %v1627, %v1631
      %v1634 = vadd.f32 %v1617, %v1632
      %v1635 = vadd.f32 %v1618, %v1632
      %v1636 = vadd.f32 %v1619, %v1632
      %v1637 = vadd.f32 %v1620, %v1632
      %v1638 = vadd.f32 %v1621, %v1632
      %v1639 = vadd.f32 %v1622, %v1632
      %v1640 = vadd.f32 %v1623, %v1632
      %v1641 = vadd.f32 %v1624, %v1632
      %v1642 = vadd.f32 %v1625, %v1632
      %v1643 = vadd.f32 %v1626, %v1632
      %v1644 = vlaneseq
      %v1645 = vshrl.u32 %v1644, 7
      %v1646 = vsub.s32 0, %v1645
      %v1647 = vrot.slane %v1477, %v1646
      %v1648 = vmul.f32 %v1211, %v1647
      %v1649 = vmul.f32 %v1212, %v1647
      %v1650 = vmul.f32 %v1213, %v1647
      %v1651 = vmul.f32 %v1214, %v1647
      %v1652 = vmul.f32 %v1215, %v1647
      %v1653 = vmul.f32 %v1216, %v1647
      %v1654 = vmul.f32 %v1217, %v1647
      %v1655 = vmul.f32 %v1218, %v1647
      %v1656 = vmul.f32 %v1219, %v1647
      %v1657 = vmul.f32 %v1220, %v1647
      %v1658 = vadd.f32 %v1648, %v1634
      %v1659 = vadd.f32 %v1649, %v1635
      %v1660 = vadd.f32 %v1650, %v1636
      %v1661 = vadd.f32 %v1651, %v1637
      %v1662 = vadd.f32 %v1652, %v1638
      %v1663 = vadd.f32 %v1653, %v1639
      %v1664 = vadd.f32 %v1654, %v1640
      %v1665 = vadd.f32 %v1655, %v1641
      %v1666 = vadd.f32 %v1656, %v1642
      %v1667 = vadd.f32 %v1657, %v1643
      %v1668 = vmax.f32 %v1658, 0.0
      %v1669 = vmax.f32 %v1659, 0.0
      %v1670 = vmax.f32 %v1660, 0.0
      %v1671 = vmax.f32 %v1661, 0.0
      %v1672 = vmax.f32 %v1662, 0.0
      %v1673 = vmax.f32 %v1663, 0.0
      %v1674 = vmax.f32 %v1664, 0.0
      %v1675 = vmax.f32 %v1665, 0.0
      %v1676 = vmax.f32 %v1666, 0.0
      %v1677 = vmax.f32 %v1667, 0.0
      %v1678 = vpack.c.bf16 %v1669, %v1668
      %v1679 = vpack.c.bf16 %v1671, %v1670
      %v1680 = vpack.c.bf16 %v1673, %v1672
      %v1681 = vpack.c.bf16 %v1675, %v1674
      %v1682 = vpack.c.bf16 %v1677, %v1676
      %v1688 = vunpack.c.l.b16 %v1678
      %v1689 = vunpack.c.h.b16 %v1678
      %v1690 = vunpack.c.l.b16 %v1679
      %v1691 = vunpack.c.h.b16 %v1679
      %v1692 = vunpack.c.l.b16 %v1680
      %v1693 = vunpack.c.h.b16 %v1680
      %v1694 = vunpack.c.l.b16 %v1681
      %v1695 = vunpack.c.h.b16 %v1681
      %v1696 = vunpack.c.l.b16 %v1682
      %v1697 = vunpack.c.h.b16 %v1682
      %v1698 = vpack.c.b16 %v1688, %v1688
      %v1699 = vpack.c.b16 %v1689, %v1689
      %v1700 = vpack.c.b16 %v1690, %v1690
      %v1701 = vpack.c.b16 %v1691, %v1691
      %v1702 = vpack.c.b16 %v1692, %v1692
      %v1703 = vpack.c.b16 %v1693, %v1693
      %v1704 = vpack.c.b16 %v1694, %v1694
      %v1705 = vpack.c.b16 %v1695, %v1695
      %v1706 = vpack.c.b16 %v1696, %v1696
      %v1707 = vpack.c.b16 %v1697, %v1697
      %vm1718 = vcmask 257024
      %1719 = vst.msk [vmem:[%s460] sm:$0xf] %vm1718, %v1698
      %1720 = vst.msk [vmem:[%s460 + $0x4] sm:$0xf] %vm1718, %v1699
      %1721 = vst.msk [vmem:[%s460 + $0x8] sm:$0xf] %vm1718, %v1700
      %1722 = vst.msk [vmem:[%s460 + $0xc] sm:$0xf] %vm1718, %v1701
      %1723 = vst.msk [vmem:[%s460 + $0x10] sm:$0xf] %vm1718, %v1702
      %1724 = vst.msk [vmem:[%s460 + $0x14] sm:$0xf] %vm1718, %v1703
      %1725 = vst.msk [vmem:[%s460 + $0x18] sm:$0xf] %vm1718, %v1704
      %1726 = vst.msk [vmem:[%s460 + $0x1c] sm:$0xf] %vm1718, %v1705
      %1727 = vst.msk [vmem:[%s460 + $0x20] sm:$0xf] %vm1718, %v1706
      %1728 = vst.msk [vmem:[%s460 + $0x24] sm:$0xf] %vm1718, %v1707
      %p1729 = scmp.lt.s32.totalorder %s24, 1
      %s1730 = scalar_select %p1729, %s24, 1
      %s1731 = smul.addr %s1730, 10
      %s1732 = smul.addr %s1731, 4
      %s1733 = scalar_lea.vmem %s13, %s1732
      // Predicated region
      $region73: #{cifar_se_basic_block.3} parent=71 // pred_check
        %p1734 = pneg %p325
      $region74: #{cifar_se_basic_block.3} parent=71 // pred_check_branch
        %1736 = sbr.rel (%p1734) target = $region76
      $region75: #{cifar_se_basic_block.3} parent=71 // pred_region
        _
      $region76: #{cifar_se_basic_block.3} parent=71 // pred_fallthru
        _
    $region72: #{cifar_se_basic_block.3} parent=5 // pred_fallthru
      _
    %p1737 = scmp.le.s32.totalorder 2, %s19
    // Predicated region
    $region77: #{cifar_se_basic_block.3} parent=5 // pred_check
      %p1738 = pneg %p1737
    $region78: #{cifar_se_basic_block.3} parent=5 // pred_check_branch
      %1740 = sbr.rel (%p1738) target = $region80
    $region79: #{cifar_se_basic_block.3} parent=5 // pred_region
      %s1741 = ssub.s32 %s19, 2
      // Predicated region
      $region81: #{cifar_se_basic_block.3} parent=79 // pred_check
        %p1742 = pneg %p331
      $region82: #{cifar_se_basic_block.3} parent=79 // pred_check_branch
        %1744 = sbr.rel (%p1742) target = $region84
      $region83: #{cifar_se_basic_block.3} parent=79 // pred_region
        %p1745 = scmp.lt.s32.totalorder %s25, 1
        %s1746 = scalar_select %p1745, %s25, 1
        %s1747 = smul.addr %s1746, 10
        %s1748 = smul.addr %s1747, 4
        %s1749 = scalar_lea.vmem %s13, %s1748
      $region84: #{cifar_se_basic_block.3} parent=79 // pred_fallthru
        _
    $region80: #{cifar_se_basic_block.3} parent=5 // pred_fallthru
      _
  $region6: #{cifar_se_basic_block.3} parent=0 // loop_footer
    %s23 = sadd.s32 1, %s19
  $region7: #{cifar_se_basic_block.3} parent=0 // loop_footer_branch
    %18 = sbr.rel target = $region3
  $region8: #{cifar_se_basic_block.3} parent=0 // loop_exit
    _

</llo_original>
